<compile_context>
chip_gen: v5e
topology: v5e:2x2
jax: 0.10.0
libtpu: 0.0.40
codegen_flags: <defaults>
</compile_context>

<pallas_src>
import functools

import jax
import jax.numpy as jnp
from jax.experimental import pallas as pl
from jax.experimental.pallas import tpu as pltpu


# ----------------------------- Pallas kernel ------------------------------ #

def _pool2d_kernel(x_ref, o_ref, *, k, pool):
    """One block: (tr*k, W, C) -> (tr, W//k, C), k x k window avg/max."""
    x = x_ref[...]                                   # (tr*k, W, C)
    if pool == 'avg':
        x = x.astype(jnp.float32)
    R, W, C = x.shape
    tr, Wo = R // k, W // k
    red = jnp.sum if pool == 'avg' else jnp.max
    # H-window reduce: split of the leading (outer) axis -> free regroup.
    y = red(x.reshape(tr, k, W, C), axis=1)          # (tr, W, C)
    # W-window reduce: sublane regroup (lane dim C untouched).
    y = red(y.reshape(tr, Wo, k, C), axis=2)         # (tr, Wo, C)
    if pool == 'avg':
        y = y * (1.0 / (k * k))
    o_ref[...] = y.astype(o_ref.dtype)


def _pick_rows_per_step(rows_out, k, w, c, itemsize, budget_bytes=2 << 20):
    """Largest divisor of rows_out whose input block fits the VMEM budget."""
    best = 1
    for d in range(1, rows_out + 1):
        if rows_out % d == 0 and d * k * w * c * itemsize <= budget_bytes:
            best = d
    return best


def _pool2d_level(x_nhwc, k, pool):
    """Pool an NHWC tensor with a k x k window, stride k (floor semantics)."""
    B, H, W, C = x_nhwc.shape
    Ho, Wo = H // k, W // k                 # PyTorch drops the remainder
    x = x_nhwc[:, :Ho * k, :Wo * k, :]
    # Flatten (B, H) -> rows; since k | H after crop, windows never cross images.
    xr = x.reshape(B * Ho * k, Wo * k, C)
    rows_out = B * Ho
    tr = _pick_rows_per_step(rows_out, k, Wo * k, C,
                             jnp.dtype(x.dtype).itemsize)
    grid = (rows_out // tr,)
    y = pl.pallas_call(
        functools.partial(_pool2d_kernel, k=k, pool=pool),
        out_shape=jax.ShapeDtypeStruct((rows_out, Wo, C), x.dtype),
        grid=grid,
        in_specs=[pl.BlockSpec((tr * k, Wo * k, C), lambda i: (i, 0, 0))],
        out_specs=pl.BlockSpec((tr, Wo, C), lambda i: (i, 0, 0)),
        compiler_params=pltpu.CompilerParams(
            dimension_semantics=("parallel",)),
    )(xr)
    return y.reshape(B, Ho, Wo, C)


# ------------------------------- JAX glue --------------------------------- #

@functools.partial(jax.jit, static_argnames=('scales', 'pool'))
def image_pyramids_forward(x, scales, pool='avg'):
    """Mirror of ImagePyramids.forward: x is NCHW, returns one NCHW per scale."""
    if pool not in ('avg', 'max'):
        raise NotImplementedError(pool)
    is_bool = (x.dtype == jnp.bool_)
    xf = x.astype(jnp.float32) if is_bool else x
    x_nhwc = jnp.transpose(xf, (0, 2, 3, 1))          # one transpose, shared
    outs = []
    for s in scales:
        k = 1 << s
        y = _pool2d_level(x_nhwc, k, pool)
        y = jnp.transpose(y, (0, 3, 1, 2))            # back to NCHW
        if is_bool:
            y = y.astype(jnp.bool_)                   # nonzero -> True, like .to(torch.bool)
        outs.append(y)
    return tuple(outs)


# ------------------------------ reference --------------------------------- #

def _ref_pool(x_nchw, k, pool):
    B, C, H, W = x_nchw.shape
    Ho, Wo = H // k, W // k
    xr = x_nchw[:, :, :Ho * k, :Wo * k].reshape(B, C, Ho, k, Wo, k)
    return xr.mean(axis=(3, 5)) if pool == 'avg' else xr.max(axis=(3, 5))


if __name__ == "__main__":
    key = jax.random.PRNGKey(0)
    B, C, H, W = 2, 4, 16, 16
    x = jax.random.normal(key, (B, C, H, W), jnp.float32)
    scales = (0, 1, 2, 3)                             # pools of 1, 2, 4, 8

    # avg pyramid
    outs = image_pyramids_forward(x, scales=scales, pool='avg')
    jax.block_until_ready(outs)
    for s, y in zip(scales, outs):
        k = 1 << s
        assert y.shape == (B, C, H // k, W // k), y.shape
        ref = _ref_pool(x, k, 'avg')
        assert jnp.allclose(y, ref, rtol=1e-5, atol=1e-5), s

    # max pyramid
    outs_max = image_pyramids_forward(x, scales=scales, pool='max')
    jax.block_until_ready(outs_max)
    for s, y in zip(scales, outs_max):
        k = 1 << s
        assert jnp.array_equal(y, _ref_pool(x, k, 'max')), s

    # bool branch (module casts bool -> f32, pools, casts back to bool)
    xb = x > 0.5
    outs_b = image_pyramids_forward(xb, scales=scales, pool='avg')
    jax.block_until_ready(outs_b)
    for s, y in zip(scales, outs_b):
        k = 1 << s
        refb = _ref_pool(xb.astype(jnp.float32), k, 'avg') != 0
        assert y.dtype == jnp.bool_ and jnp.array_equal(y, refb), s

    print("KERNEL_OK")
</pallas_src>

<mosaic_0001>
module attributes {stable_mosaic.version = 11 : i64} {
  func.func @_pool2d_kernel(%arg0: i32, %arg1: memref<32x16x4xf32, #tpu.memory_space<vmem>>, %arg2: memref<16x8x4xf32, #tpu.memory_space<vmem>>) attributes {dimension_semantics = [#tpu.dimension_semantics<parallel>], iteration_bounds = array<i64: 1>, scalar_prefetch = 0 : i64, scratch_operands = 0 : i64, tpu.core_type = #tpu.core_type<tc>, window_params = [{transform_indices = @transform_0, window_bounds = array<i64: 32, 16, 4>}, {transform_indices = @transform_1, window_bounds = array<i64: 16, 8, 4>}]} {
    %c0 = arith.constant 0 : index
    %c0_0 = arith.constant 0 : index
    %c0_1 = arith.constant 0 : index
    %0 = vector.load %arg1[%c0, %c0_0, %c0_1] : memref<32x16x4xf32, #tpu.memory_space<vmem>>, vector<32x16x4xf32>
    %1 = vector.shape_cast %0 : vector<32x16x4xf32> to vector<16x2x16x4xf32>
    %cst = arith.constant dense<0.000000e+00> : vector<16x16x4xf32>
    %2 = vector.multi_reduction <add>, %1, %cst [1] : vector<16x2x16x4xf32> to vector<16x16x4xf32>
    %3 = vector.shape_cast %2 : vector<16x16x4xf32> to vector<16x8x2x4xf32>
    %cst_2 = arith.constant dense<0.000000e+00> : vector<16x8x4xf32>
    %4 = vector.multi_reduction <add>, %3, %cst_2 [2] : vector<16x8x2x4xf32> to vector<16x8x4xf32>
    %cst_3 = arith.constant 2.500000e-01 : f32
    %5 = vector.broadcast %cst_3 : f32 to vector<16x8x4xf32>
    %6 = arith.mulf %4, %5 : vector<16x8x4xf32>
    %c0_4 = arith.constant 0 : index
    %c0_5 = arith.constant 0 : index
    %c0_6 = arith.constant 0 : index
    %7 = vector.load %arg2[%c0_4, %c0_5, %c0_6] : memref<16x8x4xf32, #tpu.memory_space<vmem>>, vector<16x8x4xf32>
    tpu.vector_store %arg2[%c0_4, %c0_5, %c0_6], %6 {strides = array<i32>} : memref<16x8x4xf32, #tpu.memory_space<vmem>>, vector<16x8x4xf32>,
    return
  }
  func.func @transform_0(%arg0: i32) -> (i32, i32, i32) {
    %c0_i32 = arith.constant 0 : i32
    %c0_i32_0 = arith.constant 0 : i32
    %c0_i32_1 = arith.constant 0 : i32
    return %arg0, %c0_i32, %c0_i32_0 : i32, i32, i32
  }
  func.func @transform_1(%arg0: i32) -> (i32, i32, i32) {
    %c0_i32 = arith.constant 0 : i32
    %c0_i32_0 = arith.constant 0 : i32
    %c0_i32_1 = arith.constant 0 : i32
    return %arg0, %c0_i32, %c0_i32_0 : i32, i32, i32
  }
}

module attributes {stable_mosaic.version = 11 : i64} {
  func.func @_pool2d_kernel(%arg0: i32, %arg1: memref<32x16x4xf32, #tpu.memory_space<vmem>>, %arg2: memref<32x16x4xf32, #tpu.memory_space<vmem>>) attributes {dimension_semantics = [#tpu.dimension_semantics<parallel>], iteration_bounds = array<i64: 1>, scalar_prefetch = 0 : i64, scratch_operands = 0 : i64, tpu.core_type = #tpu.core_type<tc>, window_params = [{transform_indices = @transform_0, window_bounds = array<i64: 32, 16, 4>}, {transform_indices = @transform_1, window_bounds = array<i64: 32, 16, 4>}]} {
    %c0 = arith.constant 0 : index
    %c0_0 = arith.constant 0 : index
    %c0_1 = arith.constant 0 : index
    %0 = vector.load %arg1[%c0, %c0_0, %c0_1] : memref<32x16x4xf32, #tpu.memory_space<vmem>>, vector<32x16x4xf32>
    %1 = vector.shape_cast %0 : vector<32x16x4xf32> to vector<32x1x16x4xf32>
    %cst = arith.constant dense<0.000000e+00> : vector<32x16x4xf32>
    %2 = vector.multi_reduction <add>, %1, %cst [1] : vector<32x1x16x4xf32> to vector<32x16x4xf32>
    %3 = vector.shape_cast %2 : vector<32x16x4xf32> to vector<32x16x1x4xf32>
    %cst_2 = arith.constant dense<0.000000e+00> : vector<32x16x4xf32>
    %4 = vector.multi_reduction <add>, %3, %cst_2 [2] : vector<32x16x1x4xf32> to vector<32x16x4xf32>
    %cst_3 = arith.constant 1.000000e+00 : f32
    %5 = vector.broadcast %cst_3 : f32 to vector<32x16x4xf32>
    %6 = arith.mulf %4, %5 : vector<32x16x4xf32>
    %c0_4 = arith.constant 0 : index
    %c0_5 = arith.constant 0 : index
    %c0_6 = arith.constant 0 : index
    %7 = vector.load %arg2[%c0_4, %c0_5, %c0_6] : memref<32x16x4xf32, #tpu.memory_space<vmem>>, vector<32x16x4xf32>
    tpu.vector_store %arg2[%c0_4, %c0_5, %c0_6], %6 {strides = array<i32>} : memref<32x16x4xf32, #tpu.memory_space<vmem>>, vector<32x16x4xf32>,
    return
  }
  func.func @transform_0(%arg0: i32) -> (i32, i32, i32) {
    %c0_i32 = arith.constant 0 : i32
    %c0_i32_0 = arith.constant 0 : i32
    %c0_i32_1 = arith.constant 0 : i32
    return %arg0, %c0_i32, %c0_i32_0 : i32, i32, i32
  }
  func.func @transform_1(%arg0: i32) -> (i32, i32, i32) {
    %c0_i32 = arith.constant 0 : i32
    %c0_i32_0 = arith.constant 0 : i32
    %c0_i32_1 = arith.constant 0 : i32
    return %arg0, %c0_i32, %c0_i32_0 : i32, i32, i32
  }
}

module attributes {stable_mosaic.version = 11 : i64} {
  func.func @_pool2d_kernel(%arg0: i32, %arg1: memref<32x16x4xf32, #tpu.memory_space<vmem>>, %arg2: memref<8x4x4xf32, #tpu.memory_space<vmem>>) attributes {dimension_semantics = [#tpu.dimension_semantics<parallel>], iteration_bounds = array<i64: 1>, scalar_prefetch = 0 : i64, scratch_operands = 0 : i64, tpu.core_type = #tpu.core_type<tc>, window_params = [{transform_indices = @transform_0, window_bounds = array<i64: 32, 16, 4>}, {transform_indices = @transform_1, window_bounds = array<i64: 8, 4, 4>}]} {
    %c0 = arith.constant 0 : index
    %c0_0 = arith.constant 0 : index
    %c0_1 = arith.constant 0 : index
    %0 = vector.load %arg1[%c0, %c0_0, %c0_1] : memref<32x16x4xf32, #tpu.memory_space<vmem>>, vector<32x16x4xf32>
    %1 = vector.shape_cast %0 : vector<32x16x4xf32> to vector<8x4x16x4xf32>
    %cst = arith.constant dense<0.000000e+00> : vector<8x16x4xf32>
    %2 = vector.multi_reduction <add>, %1, %cst [1] : vector<8x4x16x4xf32> to vector<8x16x4xf32>
    %3 = vector.shape_cast %2 : vector<8x16x4xf32> to vector<8x4x4x4xf32>
    %cst_2 = arith.constant dense<0.000000e+00> : vector<8x4x4xf32>
    %4 = vector.multi_reduction <add>, %3, %cst_2 [2] : vector<8x4x4x4xf32> to vector<8x4x4xf32>
    %cst_3 = arith.constant 6.250000e-02 : f32
    %5 = vector.broadcast %cst_3 : f32 to vector<8x4x4xf32>
    %6 = arith.mulf %4, %5 : vector<8x4x4xf32>
    %c0_4 = arith.constant 0 : index
    %c0_5 = arith.constant 0 : index
    %c0_6 = arith.constant 0 : index
    %7 = vector.load %arg2[%c0_4, %c0_5, %c0_6] : memref<8x4x4xf32, #tpu.memory_space<vmem>>, vector<8x4x4xf32>
    tpu.vector_store %arg2[%c0_4, %c0_5, %c0_6], %6 {strides = array<i32>} : memref<8x4x4xf32, #tpu.memory_space<vmem>>, vector<8x4x4xf32>,
    return
  }
  func.func @transform_0(%arg0: i32) -> (i32, i32, i32) {
    %c0_i32 = arith.constant 0 : i32
    %c0_i32_0 = arith.constant 0 : i32
    %c0_i32_1 = arith.constant 0 : i32
    return %arg0, %c0_i32, %c0_i32_0 : i32, i32, i32
  }
  func.func @transform_1(%arg0: i32) -> (i32, i32, i32) {
    %c0_i32 = arith.constant 0 : i32
    %c0_i32_0 = arith.constant 0 : i32
    %c0_i32_1 = arith.constant 0 : i32
    return %arg0, %c0_i32, %c0_i32_0 : i32, i32, i32
  }
}

module attributes {stable_mosaic.version = 11 : i64} {
  func.func @_pool2d_kernel(%arg0: i32, %arg1: memref<32x16x4xf32, #tpu.memory_space<vmem>>, %arg2: memref<4x2x4xf32, #tpu.memory_space<vmem>>) attributes {dimension_semantics = [#tpu.dimension_semantics<parallel>], iteration_bounds = array<i64: 1>, scalar_prefetch = 0 : i64, scratch_operands = 0 : i64, tpu.core_type = #tpu.core_type<tc>, window_params = [{transform_indices = @transform_0, window_bounds = array<i64: 32, 16, 4>}, {transform_indices = @transform_1, window_bounds = array<i64: 4, 2, 4>}]} {
    %c0 = arith.constant 0 : index
    %c0_0 = arith.constant 0 : index
    %c0_1 = arith.constant 0 : index
    %0 = vector.load %arg1[%c0, %c0_0, %c0_1] : memref<32x16x4xf32, #tpu.memory_space<vmem>>, vector<32x16x4xf32>
    %1 = vector.shape_cast %0 : vector<32x16x4xf32> to vector<4x8x16x4xf32>
    %cst = arith.constant dense<0.000000e+00> : vector<4x16x4xf32>
    %2 = vector.multi_reduction <add>, %1, %cst [1] : vector<4x8x16x4xf32> to vector<4x16x4xf32>
    %3 = vector.shape_cast %2 : vector<4x16x4xf32> to vector<4x2x8x4xf32>
    %cst_2 = arith.constant dense<0.000000e+00> : vector<4x2x4xf32>
    %4 = vector.multi_reduction <add>, %3, %cst_2 [2] : vector<4x2x8x4xf32> to vector<4x2x4xf32>
    %cst_3 = arith.constant 1.562500e-02 : f32
    %5 = vector.broadcast %cst_3 : f32 to vector<4x2x4xf32>
    %6 = arith.mulf %4, %5 : vector<4x2x4xf32>
    %c0_4 = arith.constant 0 : index
    %c0_5 = arith.constant 0 : index
    %c0_6 = arith.constant 0 : index
    %7 = vector.load %arg2[%c0_4, %c0_5, %c0_6] : memref<4x2x4xf32, #tpu.memory_space<vmem>>, vector<4x2x4xf32>
    tpu.vector_store %arg2[%c0_4, %c0_5, %c0_6], %6 {strides = array<i32>} : memref<4x2x4xf32, #tpu.memory_space<vmem>>, vector<4x2x4xf32>,
    return
  }
  func.func @transform_0(%arg0: i32) -> (i32, i32, i32) {
    %c0_i32 = arith.constant 0 : i32
    %c0_i32_0 = arith.constant 0 : i32
    %c0_i32_1 = arith.constant 0 : i32
    return %arg0, %c0_i32, %c0_i32_0 : i32, i32, i32
  }
  func.func @transform_1(%arg0: i32) -> (i32, i32, i32) {
    %c0_i32 = arith.constant 0 : i32
    %c0_i32_0 = arith.constant 0 : i32
    %c0_i32_1 = arith.constant 0 : i32
    return %arg0, %c0_i32, %c0_i32_0 : i32, i32, i32
  }
}

</mosaic_0001>

<llo_original>
// kernel: image_pyramids_forward.4
$region0: #{image_pyramids_forward.4}
  #allocation0 [shape = 'u32[]', space=smem, size = 0x4, offset = 0x4, fixed_abs, tag = 'smem constant byte address 0x4 - core index']
  #allocation1 [shape = 'u32[72,128]{1,0:T(1,128)}', space=vmem, size = 0x9000, scoped, tag = 'internal scratch']
  %s0 = inlined_call_operand.vmem [shape: f32[32,16,4], index: 0, kind: input, shape index: {}]
  %s1 = inlined_call_operand.vmem [shape: f32[32,16,4], index: 1, kind: output, shape index: {}]
  %s2 = sld [smem:[#allocation0]]
  $region14: #{image_pyramids_forward.4} parent=0
    _
  %s4 = ssub.s32 1, %s2
  %s5 = scalar_select 0, %s4, %s2
  // Predicated region
  $region2: #{image_pyramids_forward.4} parent=0 // pred_check
    _
  $region3: #{image_pyramids_forward.4} parent=0 // pred_check_branch
    %7 = sbr.rel (0) target = $region5
  $region4: #{image_pyramids_forward.4} parent=0 // pred_region
    _
  $region5: #{image_pyramids_forward.4} parent=0 // pred_fallthru
    _
  %v8 = vld [vmem:[%s0] sm:$0xff]
  %v9 = vld [vmem:[%s0 + $0x8] sm:$0xff]
  %v10 = vld [vmem:[%s0 + $0x10] sm:$0xff]
  %v11 = vld [vmem:[%s0 + $0x18] sm:$0xff]
  %v12 = vld [vmem:[%s0 + $0x20] sm:$0xff]
  %v13 = vld [vmem:[%s0 + $0x28] sm:$0xff]
  %v14 = vld [vmem:[%s0 + $0x30] sm:$0xff]
  %v15 = vld [vmem:[%s0 + $0x38] sm:$0xff]
  %v16 = vld [vmem:[%s0 + $0x40] sm:$0xff]
  %v17 = vld [vmem:[%s0 + $0x48] sm:$0xff]
  %v18 = vld [vmem:[%s0 + $0x50] sm:$0xff]
  %v19 = vld [vmem:[%s0 + $0x58] sm:$0xff]
  %v20 = vld [vmem:[%s0 + $0x60] sm:$0xff]
  %v21 = vld [vmem:[%s0 + $0x68] sm:$0xff]
  %v22 = vld [vmem:[%s0 + $0x70] sm:$0xff]
  %v23 = vld [vmem:[%s0 + $0x78] sm:$0xff]
  %v24 = vld [vmem:[%s0 + $0x80] sm:$0xff]
  %v25 = vld [vmem:[%s0 + $0x88] sm:$0xff]
  %v26 = vld [vmem:[%s0 + $0x90] sm:$0xff]
  %v27 = vld [vmem:[%s0 + $0x98] sm:$0xff]
  %v28 = vld [vmem:[%s0 + $0xa0] sm:$0xff]
  %v29 = vld [vmem:[%s0 + $0xa8] sm:$0xff]
  %v30 = vld [vmem:[%s0 + $0xb0] sm:$0xff]
  %v31 = vld [vmem:[%s0 + $0xb8] sm:$0xff]
  %v32 = vld [vmem:[%s0 + $0xc0] sm:$0xff]
  %v33 = vld [vmem:[%s0 + $0xc8] sm:$0xff]
  %v34 = vld [vmem:[%s0 + $0xd0] sm:$0xff]
  %v35 = vld [vmem:[%s0 + $0xd8] sm:$0xff]
  %v36 = vld [vmem:[%s0 + $0xe0] sm:$0xff]
  %v37 = vld [vmem:[%s0 + $0xe8] sm:$0xff]
  %v38 = vld [vmem:[%s0 + $0xf0] sm:$0xff]
  %v39 = vld [vmem:[%s0 + $0xf8] sm:$0xff]
  %v40 = vld [vmem:[%s0 + $0x100] sm:$0xff]
  %v41 = vld [vmem:[%s0 + $0x108] sm:$0xff]
  %v42 = vld [vmem:[%s0 + $0x110] sm:$0xff]
  %v43 = vld [vmem:[%s0 + $0x118] sm:$0xff]
  %v44 = vld [vmem:[%s0 + $0x120] sm:$0xff]
  %v45 = vld [vmem:[%s0 + $0x128] sm:$0xff]
  %v46 = vld [vmem:[%s0 + $0x130] sm:$0xff]
  %v47 = vld [vmem:[%s0 + $0x138] sm:$0xff]
  %v48 = vld [vmem:[%s0 + $0x140] sm:$0xff]
  %v49 = vld [vmem:[%s0 + $0x148] sm:$0xff]
  %v50 = vld [vmem:[%s0 + $0x150] sm:$0xff]
  %v51 = vld [vmem:[%s0 + $0x158] sm:$0xff]
  %v52 = vld [vmem:[%s0 + $0x160] sm:$0xff]
  %v53 = vld [vmem:[%s0 + $0x168] sm:$0xff]
  %v54 = vld [vmem:[%s0 + $0x170] sm:$0xff]
  %v55 = vld [vmem:[%s0 + $0x178] sm:$0xff]
  %v56 = vld [vmem:[%s0 + $0x180] sm:$0xff]
  %v57 = vld [vmem:[%s0 + $0x188] sm:$0xff]
  %v58 = vld [vmem:[%s0 + $0x190] sm:$0xff]
  %v59 = vld [vmem:[%s0 + $0x198] sm:$0xff]
  %v60 = vld [vmem:[%s0 + $0x1a0] sm:$0xff]
  %v61 = vld [vmem:[%s0 + $0x1a8] sm:$0xff]
  %v62 = vld [vmem:[%s0 + $0x1b0] sm:$0xff]
  %v63 = vld [vmem:[%s0 + $0x1b8] sm:$0xff]
  %v64 = vld [vmem:[%s0 + $0x1c0] sm:$0xff]
  %v65 = vld [vmem:[%s0 + $0x1c8] sm:$0xff]
  %v66 = vld [vmem:[%s0 + $0x1d0] sm:$0xff]
  %v67 = vld [vmem:[%s0 + $0x1d8] sm:$0xff]
  %v68 = vld [vmem:[%s0 + $0x1e0] sm:$0xff]
  %v69 = vld [vmem:[%s0 + $0x1e8] sm:$0xff]
  %v70 = vld [vmem:[%s0 + $0x1f0] sm:$0xff]
  %v71 = vld [vmem:[%s0 + $0x1f8] sm:$0xff]
  %v72 = vadd.f32 %v8, 0.0
  %v73 = vadd.f32 %v9, 0.0
  %v74 = vadd.f32 %v10, 0.0
  %v75 = vadd.f32 %v11, 0.0
  %v76 = vadd.f32 %v12, 0.0
  %v77 = vadd.f32 %v13, 0.0
  %v78 = vadd.f32 %v14, 0.0
  %v79 = vadd.f32 %v15, 0.0
  %v80 = vadd.f32 %v16, 0.0
  %v81 = vadd.f32 %v17, 0.0
  %v82 = vadd.f32 %v18, 0.0
  %v83 = vadd.f32 %v19, 0.0
  %v84 = vadd.f32 %v20, 0.0
  %v85 = vadd.f32 %v21, 0.0
  %v86 = vadd.f32 %v22, 0.0
  %v87 = vadd.f32 %v23, 0.0
  %v88 = vadd.f32 %v24, 0.0
  %v89 = vadd.f32 %v25, 0.0
  %v90 = vadd.f32 %v26, 0.0
  %v91 = vadd.f32 %v27, 0.0
  %v92 = vadd.f32 %v28, 0.0
  %v93 = vadd.f32 %v29, 0.0
  %v94 = vadd.f32 %v30, 0.0
  %v95 = vadd.f32 %v31, 0.0
  %v96 = vadd.f32 %v32, 0.0
  %v97 = vadd.f32 %v33, 0.0
  %v98 = vadd.f32 %v34, 0.0
  %v99 = vadd.f32 %v35, 0.0
  %v100 = vadd.f32 %v36, 0.0
  %v101 = vadd.f32 %v37, 0.0
  %v102 = vadd.f32 %v38, 0.0
  %v103 = vadd.f32 %v39, 0.0
  %v104 = vadd.f32 %v40, 0.0
  %v105 = vadd.f32 %v41, 0.0
  %v106 = vadd.f32 %v42, 0.0
  %v107 = vadd.f32 %v43, 0.0
  %v108 = vadd.f32 %v44, 0.0
  %v109 = vadd.f32 %v45, 0.0
  %v110 = vadd.f32 %v46, 0.0
  %v111 = vadd.f32 %v47, 0.0
  %v112 = vadd.f32 %v48, 0.0
  %v113 = vadd.f32 %v49, 0.0
  %v114 = vadd.f32 %v50, 0.0
  %v115 = vadd.f32 %v51, 0.0
  %v116 = vadd.f32 %v52, 0.0
  %v117 = vadd.f32 %v53, 0.0
  %v118 = vadd.f32 %v54, 0.0
  %v119 = vadd.f32 %v55, 0.0
  %v120 = vadd.f32 %v56, 0.0
  %v121 = vadd.f32 %v57, 0.0
  %v122 = vadd.f32 %v58, 0.0
  %v123 = vadd.f32 %v59, 0.0
  %v124 = vadd.f32 %v60, 0.0
  %v125 = vadd.f32 %v61, 0.0
  %v126 = vadd.f32 %v62, 0.0
  %v127 = vadd.f32 %v63, 0.0
  %v128 = vadd.f32 %v64, 0.0
  %v129 = vadd.f32 %v65, 0.0
  %v130 = vadd.f32 %v66, 0.0
  %v131 = vadd.f32 %v67, 0.0
  %v132 = vadd.f32 %v68, 0.0
  %v133 = vadd.f32 %v69, 0.0
  %v134 = vadd.f32 %v70, 0.0
  %v135 = vadd.f32 %v71, 0.0
  %v136 = vadd.f32 %v72, 0.0
  %v137 = vadd.f32 %v73, 0.0
  %v138 = vadd.f32 %v74, 0.0
  %v139 = vadd.f32 %v75, 0.0
  %v140 = vadd.f32 %v76, 0.0
  %v141 = vadd.f32 %v77, 0.0
  %v142 = vadd.f32 %v78, 0.0
  %v143 = vadd.f32 %v79, 0.0
  %v144 = vadd.f32 %v80, 0.0
  %v145 = vadd.f32 %v81, 0.0
  %v146 = vadd.f32 %v82, 0.0
  %v147 = vadd.f32 %v83, 0.0
  %v148 = vadd.f32 %v84, 0.0
  %v149 = vadd.f32 %v85, 0.0
  %v150 = vadd.f32 %v86, 0.0
  %v151 = vadd.f32 %v87, 0.0
  %v152 = vadd.f32 %v88, 0.0
  %v153 = vadd.f32 %v89, 0.0
  %v154 = vadd.f32 %v90, 0.0
  %v155 = vadd.f32 %v91, 0.0
  %v156 = vadd.f32 %v92, 0.0
  %v157 = vadd.f32 %v93, 0.0
  %v158 = vadd.f32 %v94, 0.0
  %v159 = vadd.f32 %v95, 0.0
  %v160 = vadd.f32 %v96, 0.0
  %v161 = vadd.f32 %v97, 0.0
  %v162 = vadd.f32 %v98, 0.0
  %v163 = vadd.f32 %v99, 0.0
  %v164 = vadd.f32 %v100, 0.0
  %v165 = vadd.f32 %v101, 0.0
  %v166 = vadd.f32 %v102, 0.0
  %v167 = vadd.f32 %v103, 0.0
  %v168 = vadd.f32 %v104, 0.0
  %v169 = vadd.f32 %v105, 0.0
  %v170 = vadd.f32 %v106, 0.0
  %v171 = vadd.f32 %v107, 0.0
  %v172 = vadd.f32 %v108, 0.0
  %v173 = vadd.f32 %v109, 0.0
  %v174 = vadd.f32 %v110, 0.0
  %v175 = vadd.f32 %v111, 0.0
  %v176 = vadd.f32 %v112, 0.0
  %v177 = vadd.f32 %v113, 0.0
  %v178 = vadd.f32 %v114, 0.0
  %v179 = vadd.f32 %v115, 0.0
  %v180 = vadd.f32 %v116, 0.0
  %v181 = vadd.f32 %v117, 0.0
  %v182 = vadd.f32 %v118, 0.0
  %v183 = vadd.f32 %v119, 0.0
  %v184 = vadd.f32 %v120, 0.0
  %v185 = vadd.f32 %v121, 0.0
  %v186 = vadd.f32 %v122, 0.0
  %v187 = vadd.f32 %v123, 0.0
  %v188 = vadd.f32 %v124, 0.0
  %v189 = vadd.f32 %v125, 0.0
  %v190 = vadd.f32 %v126, 0.0
  %v191 = vadd.f32 %v127, 0.0
  %v192 = vadd.f32 %v128, 0.0
  %v193 = vadd.f32 %v129, 0.0
  %v194 = vadd.f32 %v130, 0.0
  %v195 = vadd.f32 %v131, 0.0
  %v196 = vadd.f32 %v132, 0.0
  %v197 = vadd.f32 %v133, 0.0
  %v198 = vadd.f32 %v134, 0.0
  %v199 = vadd.f32 %v135, 0.0
  %vm200 = vcmask 31744
  %201 = vst.msk [vmem:[%s1] sm:$0xff] %vm200, %v136
  %202 = vst.msk [vmem:[%s1 + $0x8] sm:$0xff] %vm200, %v137
  %203 = vst.msk [vmem:[%s1 + $0x10] sm:$0xff] %vm200, %v138
  %204 = vst.msk [vmem:[%s1 + $0x18] sm:$0xff] %vm200, %v139
  %205 = vst.msk [vmem:[%s1 + $0x20] sm:$0xff] %vm200, %v140
  %206 = vst.msk [vmem:[%s1 + $0x28] sm:$0xff] %vm200, %v141
  %207 = vst.msk [vmem:[%s1 + $0x30] sm:$0xff] %vm200, %v142
  %208 = vst.msk [vmem:[%s1 + $0x38] sm:$0xff] %vm200, %v143
  %209 = vst.msk [vmem:[%s1 + $0x40] sm:$0xff] %vm200, %v144
  %210 = vst.msk [vmem:[%s1 + $0x48] sm:$0xff] %vm200, %v145
  %211 = vst.msk [vmem:[%s1 + $0x50] sm:$0xff] %vm200, %v146
  %212 = vst.msk [vmem:[%s1 + $0x58] sm:$0xff] %vm200, %v147
  %213 = vst.msk [vmem:[%s1 + $0x60] sm:$0xff] %vm200, %v148
  %214 = vst.msk [vmem:[%s1 + $0x68] sm:$0xff] %vm200, %v149
  %215 = vst.msk [vmem:[%s1 + $0x70] sm:$0xff] %vm200, %v150
  %216 = vst.msk [vmem:[%s1 + $0x78] sm:$0xff] %vm200, %v151
  %217 = vst.msk [vmem:[%s1 + $0x80] sm:$0xff] %vm200, %v152
  %218 = vst.msk [vmem:[%s1 + $0x88] sm:$0xff] %vm200, %v153
  %219 = vst.msk [vmem:[%s1 + $0x90] sm:$0xff] %vm200, %v154
  %220 = vst.msk [vmem:[%s1 + $0x98] sm:$0xff] %vm200, %v155
  %221 = vst.msk [vmem:[%s1 + $0xa0] sm:$0xff] %vm200, %v156
  %222 = vst.msk [vmem:[%s1 + $0xa8] sm:$0xff] %vm200, %v157
  %223 = vst.msk [vmem:[%s1 + $0xb0] sm:$0xff] %vm200, %v158
  %224 = vst.msk [vmem:[%s1 + $0xb8] sm:$0xff] %vm200, %v159
  %225 = vst.msk [vmem:[%s1 + $0xc0] sm:$0xff] %vm200, %v160
  %226 = vst.msk [vmem:[%s1 + $0xc8] sm:$0xff] %vm200, %v161
  %227 = vst.msk [vmem:[%s1 + $0xd0] sm:$0xff] %vm200, %v162
  %228 = vst.msk [vmem:[%s1 + $0xd8] sm:$0xff] %vm200, %v163
  %229 = vst.msk [vmem:[%s1 + $0xe0] sm:$0xff] %vm200, %v164
  %230 = vst.msk [vmem:[%s1 + $0xe8] sm:$0xff] %vm200, %v165
  %231 = vst.msk [vmem:[%s1 + $0xf0] sm:$0xff] %vm200, %v166
  %232 = vst.msk [vmem:[%s1 + $0xf8] sm:$0xff] %vm200, %v167
  %233 = vst.msk [vmem:[%s1 + $0x100] sm:$0xff] %vm200, %v168
  %234 = vst.msk [vmem:[%s1 + $0x108] sm:$0xff] %vm200, %v169
  %235 = vst.msk [vmem:[%s1 + $0x110] sm:$0xff] %vm200, %v170
  %236 = vst.msk [vmem:[%s1 + $0x118] sm:$0xff] %vm200, %v171
  %237 = vst.msk [vmem:[%s1 + $0x120] sm:$0xff] %vm200, %v172
  %238 = vst.msk [vmem:[%s1 + $0x128] sm:$0xff] %vm200, %v173
  %239 = vst.msk [vmem:[%s1 + $0x130] sm:$0xff] %vm200, %v174
  %240 = vst.msk [vmem:[%s1 + $0x138] sm:$0xff] %vm200, %v175
  %241 = vst.msk [vmem:[%s1 + $0x140] sm:$0xff] %vm200, %v176
  %242 = vst.msk [vmem:[%s1 + $0x148] sm:$0xff] %vm200, %v177
  %243 = vst.msk [vmem:[%s1 + $0x150] sm:$0xff] %vm200, %v178
  %244 = vst.msk [vmem:[%s1 + $0x158] sm:$0xff] %vm200, %v179
  %245 = vst.msk [vmem:[%s1 + $0x160] sm:$0xff] %vm200, %v180
  %246 = vst.msk [vmem:[%s1 + $0x168] sm:$0xff] %vm200, %v181
  %247 = vst.msk [vmem:[%s1 + $0x170] sm:$0xff] %vm200, %v182
  %248 = vst.msk [vmem:[%s1 + $0x178] sm:$0xff] %vm200, %v183
  %249 = vst.msk [vmem:[%s1 + $0x180] sm:$0xff] %vm200, %v184
  %250 = vst.msk [vmem:[%s1 + $0x188] sm:$0xff] %vm200, %v185
  %251 = vst.msk [vmem:[%s1 + $0x190] sm:$0xff] %vm200, %v186
  %252 = vst.msk [vmem:[%s1 + $0x198] sm:$0xff] %vm200, %v187
  %253 = vst.msk [vmem:[%s1 + $0x1a0] sm:$0xff] %vm200, %v188
  %254 = vst.msk [vmem:[%s1 + $0x1a8] sm:$0xff] %vm200, %v189
  %255 = vst.msk [vmem:[%s1 + $0x1b0] sm:$0xff] %vm200, %v190
  %256 = vst.msk [vmem:[%s1 + $0x1b8] sm:$0xff] %vm200, %v191
  %257 = vst.msk [vmem:[%s1 + $0x1c0] sm:$0xff] %vm200, %v192
  %258 = vst.msk [vmem:[%s1 + $0x1c8] sm:$0xff] %vm200, %v193
  %259 = vst.msk [vmem:[%s1 + $0x1d0] sm:$0xff] %vm200, %v194
  %260 = vst.msk [vmem:[%s1 + $0x1d8] sm:$0xff] %vm200, %v195
  %261 = vst.msk [vmem:[%s1 + $0x1e0] sm:$0xff] %vm200, %v196
  %262 = vst.msk [vmem:[%s1 + $0x1e8] sm:$0xff] %vm200, %v197
  %263 = vst.msk [vmem:[%s1 + $0x1f0] sm:$0xff] %vm200, %v198
  %264 = vst.msk [vmem:[%s1 + $0x1f8] sm:$0xff] %vm200, %v199
  // Predicated region
  $region6: #{image_pyramids_forward.4} parent=0 // pred_check
    _
  $region7: #{image_pyramids_forward.4} parent=0 // pred_check_branch
    %266 = sbr.rel (0) target = $region9
  $region8: #{image_pyramids_forward.4} parent=0 // pred_region
    _
  $region9: #{image_pyramids_forward.4} parent=0 // pred_fallthru
    _
  // Predicated region
  $region10: #{image_pyramids_forward.4} parent=0 // pred_check
    _
  $region11: #{image_pyramids_forward.4} parent=0 // pred_check_branch
    %268 = sbr.rel (0) target = $region13
  $region12: #{image_pyramids_forward.4} parent=0 // pred_region
    _
  $region13: #{image_pyramids_forward.4} parent=0 // pred_fallthru
    _

// kernel: image_pyramids_forward.5
$region0: #{image_pyramids_forward.5}
  #allocation0 [shape = 'u32[]', space=smem, size = 0x4, offset = 0x4, fixed_abs, tag = 'smem constant byte address 0x4 - core index']
  #allocation1 [shape = 'u32[72,128]{1,0:T(1,128)}', space=vmem, size = 0x9000, scoped, tag = 'internal scratch']
  %s0 = inlined_call_operand.vmem [shape: f32[32,16,4], index: 0, kind: input, shape index: {}]
  %s1 = inlined_call_operand.vmem [shape: f32[16,8,4], index: 1, kind: output, shape index: {}]
  %s2 = sld [smem:[#allocation0]]
  $region14: #{image_pyramids_forward.5} parent=0
    _
  %s4 = ssub.s32 1, %s2
  %s5 = scalar_select 0, %s4, %s2
  // Predicated region
  $region2: #{image_pyramids_forward.5} parent=0 // pred_check
    _
  $region3: #{image_pyramids_forward.5} parent=0 // pred_check_branch
    %7 = sbr.rel (0) target = $region5
  $region4: #{image_pyramids_forward.5} parent=0 // pred_region
    _
  $region5: #{image_pyramids_forward.5} parent=0 // pred_fallthru
    _
  %v8 = vld [vmem:[%s0] sm:$0xff]
  %v9 = vld [vmem:[%s0 + $0x8] sm:$0xff]
  %v10 = vld [vmem:[%s0 + $0x10] sm:$0xff]
  %v11 = vld [vmem:[%s0 + $0x18] sm:$0xff]
  %v12 = vld [vmem:[%s0 + $0x20] sm:$0xff]
  %v13 = vld [vmem:[%s0 + $0x28] sm:$0xff]
  %v14 = vld [vmem:[%s0 + $0x30] sm:$0xff]
  %v15 = vld [vmem:[%s0 + $0x38] sm:$0xff]
  %v16 = vld [vmem:[%s0 + $0x40] sm:$0xff]
  %v17 = vld [vmem:[%s0 + $0x48] sm:$0xff]
  %v18 = vld [vmem:[%s0 + $0x50] sm:$0xff]
  %v19 = vld [vmem:[%s0 + $0x58] sm:$0xff]
  %v20 = vld [vmem:[%s0 + $0x60] sm:$0xff]
  %v21 = vld [vmem:[%s0 + $0x68] sm:$0xff]
  %v22 = vld [vmem:[%s0 + $0x70] sm:$0xff]
  %v23 = vld [vmem:[%s0 + $0x78] sm:$0xff]
  %v24 = vld [vmem:[%s0 + $0x80] sm:$0xff]
  %v25 = vld [vmem:[%s0 + $0x88] sm:$0xff]
  %v26 = vld [vmem:[%s0 + $0x90] sm:$0xff]
  %v27 = vld [vmem:[%s0 + $0x98] sm:$0xff]
  %v28 = vld [vmem:[%s0 + $0xa0] sm:$0xff]
  %v29 = vld [vmem:[%s0 + $0xa8] sm:$0xff]
  %v30 = vld [vmem:[%s0 + $0xb0] sm:$0xff]
  %v31 = vld [vmem:[%s0 + $0xb8] sm:$0xff]
  %v32 = vld [vmem:[%s0 + $0xc0] sm:$0xff]
  %v33 = vld [vmem:[%s0 + $0xc8] sm:$0xff]
  %v34 = vld [vmem:[%s0 + $0xd0] sm:$0xff]
  %v35 = vld [vmem:[%s0 + $0xd8] sm:$0xff]
  %v36 = vld [vmem:[%s0 + $0xe0] sm:$0xff]
  %v37 = vld [vmem:[%s0 + $0xe8] sm:$0xff]
  %v38 = vld [vmem:[%s0 + $0xf0] sm:$0xff]
  %v39 = vld [vmem:[%s0 + $0xf8] sm:$0xff]
  %v40 = vld [vmem:[%s0 + $0x100] sm:$0xff]
  %v41 = vld [vmem:[%s0 + $0x108] sm:$0xff]
  %v42 = vld [vmem:[%s0 + $0x110] sm:$0xff]
  %v43 = vld [vmem:[%s0 + $0x118] sm:$0xff]
  %v44 = vld [vmem:[%s0 + $0x120] sm:$0xff]
  %v45 = vld [vmem:[%s0 + $0x128] sm:$0xff]
  %v46 = vld [vmem:[%s0 + $0x130] sm:$0xff]
  %v47 = vld [vmem:[%s0 + $0x138] sm:$0xff]
  %v48 = vld [vmem:[%s0 + $0x140] sm:$0xff]
  %v49 = vld [vmem:[%s0 + $0x148] sm:$0xff]
  %v50 = vld [vmem:[%s0 + $0x150] sm:$0xff]
  %v51 = vld [vmem:[%s0 + $0x158] sm:$0xff]
  %v52 = vld [vmem:[%s0 + $0x160] sm:$0xff]
  %v53 = vld [vmem:[%s0 + $0x168] sm:$0xff]
  %v54 = vld [vmem:[%s0 + $0x170] sm:$0xff]
  %v55 = vld [vmem:[%s0 + $0x178] sm:$0xff]
  %v56 = vld [vmem:[%s0 + $0x180] sm:$0xff]
  %v57 = vld [vmem:[%s0 + $0x188] sm:$0xff]
  %v58 = vld [vmem:[%s0 + $0x190] sm:$0xff]
  %v59 = vld [vmem:[%s0 + $0x198] sm:$0xff]
  %v60 = vld [vmem:[%s0 + $0x1a0] sm:$0xff]
  %v61 = vld [vmem:[%s0 + $0x1a8] sm:$0xff]
  %v62 = vld [vmem:[%s0 + $0x1b0] sm:$0xff]
  %v63 = vld [vmem:[%s0 + $0x1b8] sm:$0xff]
  %v64 = vld [vmem:[%s0 + $0x1c0] sm:$0xff]
  %v65 = vld [vmem:[%s0 + $0x1c8] sm:$0xff]
  %v66 = vld [vmem:[%s0 + $0x1d0] sm:$0xff]
  %v67 = vld [vmem:[%s0 + $0x1d8] sm:$0xff]
  %v68 = vld [vmem:[%s0 + $0x1e0] sm:$0xff]
  %v69 = vld [vmem:[%s0 + $0x1e8] sm:$0xff]
  %v70 = vld [vmem:[%s0 + $0x1f0] sm:$0xff]
  %v71 = vld [vmem:[%s0 + $0x1f8] sm:$0xff]
  %vm72 = vcmask 31744
  %v73 = vsel %vm72, %v8, 0.0
  %v74 = vsel %vm72, %v10, 0.0
  %v75 = vadd.f32 %v73, %v74
  %v76 = vsel %vm72, %v9, 0.0
  %v77 = vsel %vm72, %v11, 0.0
  %v78 = vadd.f32 %v76, %v77
  %v79 = vsel %vm72, %v12, 0.0
  %v80 = vsel %vm72, %v14, 0.0
  %v81 = vadd.f32 %v79, %v80
  %v82 = vsel %vm72, %v13, 0.0
  %v83 = vsel %vm72, %v15, 0.0
  %v84 = vadd.f32 %v82, %v83
  %v85 = vsel %vm72, %v16, 0.0
  %v86 = vsel %vm72, %v18, 0.0
  %v87 = vadd.f32 %v85, %v86
  %v88 = vsel %vm72, %v17, 0.0
  %v89 = vsel %vm72, %v19, 0.0
  %v90 = vadd.f32 %v88, %v89
  %v91 = vsel %vm72, %v20, 0.0
  %v92 = vsel %vm72, %v22, 0.0
  %v93 = vadd.f32 %v91, %v92
  %v94 = vsel %vm72, %v21, 0.0
  %v95 = vsel %vm72, %v23, 0.0
  %v96 = vadd.f32 %v94, %v95
  %v97 = vsel %vm72, %v24, 0.0
  %v98 = vsel %vm72, %v26, 0.0
  %v99 = vadd.f32 %v97, %v98
  %v100 = vsel %vm72, %v25, 0.0
  %v101 = vsel %vm72, %v27, 0.0
  %v102 = vadd.f32 %v100, %v101
  %v103 = vsel %vm72, %v28, 0.0
  %v104 = vsel %vm72, %v30, 0.0
  %v105 = vadd.f32 %v103, %v104
  %v106 = vsel %vm72, %v29, 0.0
  %v107 = vsel %vm72, %v31, 0.0
  %v108 = vadd.f32 %v106, %v107
  %v109 = vsel %vm72, %v32, 0.0
  %v110 = vsel %vm72, %v34, 0.0
  %v111 = vadd.f32 %v109, %v110
  %v112 = vsel %vm72, %v33, 0.0
  %v113 = vsel %vm72, %v35, 0.0
  %v114 = vadd.f32 %v112, %v113
  %v115 = vsel %vm72, %v36, 0.0
  %v116 = vsel %vm72, %v38, 0.0
  %v117 = vadd.f32 %v115, %v116
  %v118 = vsel %vm72, %v37, 0.0
  %v119 = vsel %vm72, %v39, 0.0
  %v120 = vadd.f32 %v118, %v119
  %v121 = vsel %vm72, %v40, 0.0
  %v122 = vsel %vm72, %v42, 0.0
  %v123 = vadd.f32 %v121, %v122
  %v124 = vsel %vm72, %v41, 0.0
  %v125 = vsel %vm72, %v43, 0.0
  %v126 = vadd.f32 %v124, %v125
  %v127 = vsel %vm72, %v44, 0.0
  %v128 = vsel %vm72, %v46, 0.0
  %v129 = vadd.f32 %v127, %v128
  %v130 = vsel %vm72, %v45, 0.0
  %v131 = vsel %vm72, %v47, 0.0
  %v132 = vadd.f32 %v130, %v131
  %v133 = vsel %vm72, %v48, 0.0
  %v134 = vsel %vm72, %v50, 0.0
  %v135 = vadd.f32 %v133, %v134
  %v136 = vsel %vm72, %v49, 0.0
  %v137 = vsel %vm72, %v51, 0.0
  %v138 = vadd.f32 %v136, %v137
  %v139 = vsel %vm72, %v52, 0.0
  %v140 = vsel %vm72, %v54, 0.0
  %v141 = vadd.f32 %v139, %v140
  %v142 = vsel %vm72, %v53, 0.0
  %v143 = vsel %vm72, %v55, 0.0
  %v144 = vadd.f32 %v142, %v143
  %v145 = vsel %vm72, %v56, 0.0
  %v146 = vsel %vm72, %v58, 0.0
  %v147 = vadd.f32 %v145, %v146
  %v148 = vsel %vm72, %v57, 0.0
  %v149 = vsel %vm72, %v59, 0.0
  %v150 = vadd.f32 %v148, %v149
  %v151 = vsel %vm72, %v60, 0.0
  %v152 = vsel %vm72, %v62, 0.0
  %v153 = vadd.f32 %v151, %v152
  %v154 = vsel %vm72, %v61, 0.0
  %v155 = vsel %vm72, %v63, 0.0
  %v156 = vadd.f32 %v154, %v155
  %v157 = vsel %vm72, %v64, 0.0
  %v158 = vsel %vm72, %v66, 0.0
  %v159 = vadd.f32 %v157, %v158
  %v160 = vsel %vm72, %v65, 0.0
  %v161 = vsel %vm72, %v67, 0.0
  %v162 = vadd.f32 %v160, %v161
  %v163 = vsel %vm72, %v68, 0.0
  %v164 = vsel %vm72, %v70, 0.0
  %v165 = vadd.f32 %v163, %v164
  %v166 = vsel %vm72, %v69, 0.0
  %v167 = vsel %vm72, %v71, 0.0
  %v168 = vadd.f32 %v166, %v167
  %v201 = vrot.slane %v75, 2
  %v202 = vrot.slane %v75, 4
  %v203 = vrot.slane %v75, 6
  %v204 = vrot.slane %v78, 2
  %v205 = vrot.slane %v78, 4
  %v206 = vrot.slane %v78, 6
  %v207 = vrot.slane %v81, 2
  %v208 = vrot.slane %v81, 4
  %v209 = vrot.slane %v81, 6
  %v210 = vrot.slane %v84, 2
  %v211 = vrot.slane %v84, 4
  %v212 = vrot.slane %v84, 6
  %v213 = vrot.slane %v87, 2
  %v214 = vrot.slane %v87, 4
  %v215 = vrot.slane %v87, 6
  %v216 = vrot.slane %v90, 2
  %v217 = vrot.slane %v90, 4
  %v218 = vrot.slane %v90, 6
  %v219 = vrot.slane %v93, 2
  %v220 = vrot.slane %v93, 4
  %v221 = vrot.slane %v93, 6
  %v222 = vrot.slane %v96, 2
  %v223 = vrot.slane %v96, 4
  %v224 = vrot.slane %v96, 6
  %v225 = vrot.slane %v99, 2
  %v226 = vrot.slane %v99, 4
  %v227 = vrot.slane %v99, 6
  %v228 = vrot.slane %v102, 2
  %v229 = vrot.slane %v102, 4
  %v230 = vrot.slane %v102, 6
  %v231 = vrot.slane %v105, 2
  %v232 = vrot.slane %v105, 4
  %v233 = vrot.slane %v105, 6
  %v234 = vrot.slane %v108, 2
  %v235 = vrot.slane %v108, 4
  %v236 = vrot.slane %v108, 6
  %v237 = vrot.slane %v111, 2
  %v238 = vrot.slane %v111, 4
  %v239 = vrot.slane %v111, 6
  %v240 = vrot.slane %v114, 2
  %v241 = vrot.slane %v114, 4
  %v242 = vrot.slane %v114, 6
  %v243 = vrot.slane %v117, 2
  %v244 = vrot.slane %v117, 4
  %v245 = vrot.slane %v117, 6
  %v246 = vrot.slane %v120, 2
  %v247 = vrot.slane %v120, 4
  %v248 = vrot.slane %v120, 6
  %v249 = vrot.slane %v123, 2
  %v250 = vrot.slane %v123, 4
  %v251 = vrot.slane %v123, 6
  %v252 = vrot.slane %v126, 2
  %v253 = vrot.slane %v126, 4
  %v254 = vrot.slane %v126, 6
  %v255 = vrot.slane %v129, 2
  %v256 = vrot.slane %v129, 4
  %v257 = vrot.slane %v129, 6
  %v258 = vrot.slane %v132, 2
  %v259 = vrot.slane %v132, 4
  %v260 = vrot.slane %v132, 6
  %v261 = vrot.slane %v135, 2
  %v262 = vrot.slane %v135, 4
  %v263 = vrot.slane %v135, 6
  %v264 = vrot.slane %v138, 2
  %v265 = vrot.slane %v138, 4
  %v266 = vrot.slane %v138, 6
  %v267 = vrot.slane %v141, 2
  %v268 = vrot.slane %v141, 4
  %v269 = vrot.slane %v141, 6
  %v270 = vrot.slane %v144, 2
  %v271 = vrot.slane %v144, 4
  %v272 = vrot.slane %v144, 6
  %v273 = vrot.slane %v147, 2
  %v274 = vrot.slane %v147, 4
  %v275 = vrot.slane %v147, 6
  %v276 = vrot.slane %v150, 2
  %v277 = vrot.slane %v150, 4
  %v278 = vrot.slane %v150, 6
  %v279 = vrot.slane %v153, 2
  %v280 = vrot.slane %v153, 4
  %v281 = vrot.slane %v153, 6
  %v282 = vrot.slane %v156, 2
  %v283 = vrot.slane %v156, 4
  %v284 = vrot.slane %v156, 6
  %v285 = vrot.slane %v159, 2
  %v286 = vrot.slane %v159, 4
  %v287 = vrot.slane %v159, 6
  %v288 = vrot.slane %v162, 2
  %v289 = vrot.slane %v162, 4
  %v290 = vrot.slane %v162, 6
  %v291 = vrot.slane %v165, 2
  %v292 = vrot.slane %v165, 4
  %v293 = vrot.slane %v165, 6
  %v294 = vrot.slane %v168, 2
  %v295 = vrot.slane %v168, 4
  %v296 = vrot.slane %v168, 6
  %vm393 = vcmask 25600
  %v394 = vsel %vm393, %v75, 0.0
  %v395 = vrot.slane %v394, 4
  %v396 = vadd.f32 %v394, %v395
  %v397 = vrot.slane %v396, 2
  %v398 = vadd.f32 %v396, %v397
  %v399 = vrot.slane %v398, 1
  %v400 = vadd.f32 %v398, %v399
  %v401 = vsel %vm393, %v201, 0.0
  %v402 = vrot.slane %v401, 4
  %v403 = vadd.f32 %v401, %v402
  %v404 = vrot.slane %v403, 2
  %v405 = vadd.f32 %v403, %v404
  %v406 = vrot.slane %v405, 1
  %v407 = vadd.f32 %v405, %v406
  %v408 = vsel %vm393, %v202, 0.0
  %v409 = vrot.slane %v408, 4
  %v410 = vadd.f32 %v408, %v409
  %v411 = vrot.slane %v410, 2
  %v412 = vadd.f32 %v410, %v411
  %v413 = vrot.slane %v412, 1
  %v414 = vadd.f32 %v412, %v413
  %v415 = vsel %vm393, %v203, 0.0
  %v416 = vrot.slane %v415, 4
  %v417 = vadd.f32 %v415, %v416
  %v418 = vrot.slane %v417, 2
  %v419 = vadd.f32 %v417, %v418
  %v420 = vrot.slane %v419, 1
  %v421 = vadd.f32 %v419, %v420
  %v422 = vsel %vm393, %v78, 0.0
  %v423 = vrot.slane %v422, 4
  %v424 = vadd.f32 %v422, %v423
  %v425 = vrot.slane %v424, 2
  %v426 = vadd.f32 %v424, %v425
  %v427 = vrot.slane %v426, 1
  %v428 = vadd.f32 %v426, %v427
  %v429 = vsel %vm393, %v204, 0.0
  %v430 = vrot.slane %v429, 4
  %v431 = vadd.f32 %v429, %v430
  %v432 = vrot.slane %v431, 2
  %v433 = vadd.f32 %v431, %v432
  %v434 = vrot.slane %v433, 1
  %v435 = vadd.f32 %v433, %v434
  %v436 = vsel %vm393, %v205, 0.0
  %v437 = vrot.slane %v436, 4
  %v438 = vadd.f32 %v436, %v437
  %v439 = vrot.slane %v438, 2
  %v440 = vadd.f32 %v438, %v439
  %v441 = vrot.slane %v440, 1
  %v442 = vadd.f32 %v440, %v441
  %v443 = vsel %vm393, %v206, 0.0
  %v444 = vrot.slane %v443, 4
  %v445 = vadd.f32 %v443, %v444
  %v446 = vrot.slane %v445, 2
  %v447 = vadd.f32 %v445, %v446
  %v448 = vrot.slane %v447, 1
  %v449 = vadd.f32 %v447, %v448
  %v450 = vsel %vm393, %v81, 0.0
  %v451 = vrot.slane %v450, 4
  %v452 = vadd.f32 %v450, %v451
  %v453 = vrot.slane %v452, 2
  %v454 = vadd.f32 %v452, %v453
  %v455 = vrot.slane %v454, 1
  %v456 = vadd.f32 %v454, %v455
  %v457 = vsel %vm393, %v207, 0.0
  %v458 = vrot.slane %v457, 4
  %v459 = vadd.f32 %v457, %v458
  %v460 = vrot.slane %v459, 2
  %v461 = vadd.f32 %v459, %v460
  %v462 = vrot.slane %v461, 1
  %v463 = vadd.f32 %v461, %v462
  %v464 = vsel %vm393, %v208, 0.0
  %v465 = vrot.slane %v464, 4
  %v466 = vadd.f32 %v464, %v465
  %v467 = vrot.slane %v466, 2
  %v468 = vadd.f32 %v466, %v467
  %v469 = vrot.slane %v468, 1
  %v470 = vadd.f32 %v468, %v469
  %v471 = vsel %vm393, %v209, 0.0
  %v472 = vrot.slane %v471, 4
  %v473 = vadd.f32 %v471, %v472
  %v474 = vrot.slane %v473, 2
  %v475 = vadd.f32 %v473, %v474
  %v476 = vrot.slane %v475, 1
  %v477 = vadd.f32 %v475, %v476
  %v478 = vsel %vm393, %v84, 0.0
  %v479 = vrot.slane %v478, 4
  %v480 = vadd.f32 %v478, %v479
  %v481 = vrot.slane %v480, 2
  %v482 = vadd.f32 %v480, %v481
  %v483 = vrot.slane %v482, 1
  %v484 = vadd.f32 %v482, %v483
  %v485 = vsel %vm393, %v210, 0.0
  %v486 = vrot.slane %v485, 4
  %v487 = vadd.f32 %v485, %v486
  %v488 = vrot.slane %v487, 2
  %v489 = vadd.f32 %v487, %v488
  %v490 = vrot.slane %v489, 1
  %v491 = vadd.f32 %v489, %v490
  %v492 = vsel %vm393, %v211, 0.0
  %v493 = vrot.slane %v492, 4
  %v494 = vadd.f32 %v492, %v493
  %v495 = vrot.slane %v494, 2
  %v496 = vadd.f32 %v494, %v495
  %v497 = vrot.slane %v496, 1
  %v498 = vadd.f32 %v496, %v497
  %v499 = vsel %vm393, %v212, 0.0
  %v500 = vrot.slane %v499, 4
  %v501 = vadd.f32 %v499, %v500
  %v502 = vrot.slane %v501, 2
  %v503 = vadd.f32 %v501, %v502
  %v504 = vrot.slane %v503, 1
  %v505 = vadd.f32 %v503, %v504
  %v506 = vsel %vm393, %v87, 0.0
  %v507 = vrot.slane %v506, 4
  %v508 = vadd.f32 %v506, %v507
  %v509 = vrot.slane %v508, 2
  %v510 = vadd.f32 %v508, %v509
  %v511 = vrot.slane %v510, 1
  %v512 = vadd.f32 %v510, %v511
  %v513 = vsel %vm393, %v213, 0.0
  %v514 = vrot.slane %v513, 4
  %v515 = vadd.f32 %v513, %v514
  %v516 = vrot.slane %v515, 2
  %v517 = vadd.f32 %v515, %v516
  %v518 = vrot.slane %v517, 1
  %v519 = vadd.f32 %v517, %v518
  %v520 = vsel %vm393, %v214, 0.0
  %v521 = vrot.slane %v520, 4
  %v522 = vadd.f32 %v520, %v521
  %v523 = vrot.slane %v522, 2
  %v524 = vadd.f32 %v522, %v523
  %v525 = vrot.slane %v524, 1
  %v526 = vadd.f32 %v524, %v525
  %v527 = vsel %vm393, %v215, 0.0
  %v528 = vrot.slane %v527, 4
  %v529 = vadd.f32 %v527, %v528
  %v530 = vrot.slane %v529, 2
  %v531 = vadd.f32 %v529, %v530
  %v532 = vrot.slane %v531, 1
  %v533 = vadd.f32 %v531, %v532
  %v534 = vsel %vm393, %v90, 0.0
  %v535 = vrot.slane %v534, 4
  %v536 = vadd.f32 %v534, %v535
  %v537 = vrot.slane %v536, 2
  %v538 = vadd.f32 %v536, %v537
  %v539 = vrot.slane %v538, 1
  %v540 = vadd.f32 %v538, %v539
  %v541 = vsel %vm393, %v216, 0.0
  %v542 = vrot.slane %v541, 4
  %v543 = vadd.f32 %v541, %v542
  %v544 = vrot.slane %v543, 2
  %v545 = vadd.f32 %v543, %v544
  %v546 = vrot.slane %v545, 1
  %v547 = vadd.f32 %v545, %v546
  %v548 = vsel %vm393, %v217, 0.0
  %v549 = vrot.slane %v548, 4
  %v550 = vadd.f32 %v548, %v549
  %v551 = vrot.slane %v550, 2
  %v552 = vadd.f32 %v550, %v551
  %v553 = vrot.slane %v552, 1
  %v554 = vadd.f32 %v552, %v553
  %v555 = vsel %vm393, %v218, 0.0
  %v556 = vrot.slane %v555, 4
  %v557 = vadd.f32 %v555, %v556
  %v558 = vrot.slane %v557, 2
  %v559 = vadd.f32 %v557, %v558
  %v560 = vrot.slane %v559, 1
  %v561 = vadd.f32 %v559, %v560
  %v562 = vsel %vm393, %v93, 0.0
  %v563 = vrot.slane %v562, 4
  %v564 = vadd.f32 %v562, %v563
  %v565 = vrot.slane %v564, 2
  %v566 = vadd.f32 %v564, %v565
  %v567 = vrot.slane %v566, 1
  %v568 = vadd.f32 %v566, %v567
  %v569 = vsel %vm393, %v219, 0.0
  %v570 = vrot.slane %v569, 4
  %v571 = vadd.f32 %v569, %v570
  %v572 = vrot.slane %v571, 2
  %v573 = vadd.f32 %v571, %v572
  %v574 = vrot.slane %v573, 1
  %v575 = vadd.f32 %v573, %v574
  %v576 = vsel %vm393, %v220, 0.0
  %v577 = vrot.slane %v576, 4
  %v578 = vadd.f32 %v576, %v577
  %v579 = vrot.slane %v578, 2
  %v580 = vadd.f32 %v578, %v579
  %v581 = vrot.slane %v580, 1
  %v582 = vadd.f32 %v580, %v581
  %v583 = vsel %vm393, %v221, 0.0
  %v584 = vrot.slane %v583, 4
  %v585 = vadd.f32 %v583, %v584
  %v586 = vrot.slane %v585, 2
  %v587 = vadd.f32 %v585, %v586
  %v588 = vrot.slane %v587, 1
  %v589 = vadd.f32 %v587, %v588
  %v590 = vsel %vm393, %v96, 0.0
  %v591 = vrot.slane %v590, 4
  %v592 = vadd.f32 %v590, %v591
  %v593 = vrot.slane %v592, 2
  %v594 = vadd.f32 %v592, %v593
  %v595 = vrot.slane %v594, 1
  %v596 = vadd.f32 %v594, %v595
  %v597 = vsel %vm393, %v222, 0.0
  %v598 = vrot.slane %v597, 4
  %v599 = vadd.f32 %v597, %v598
  %v600 = vrot.slane %v599, 2
  %v601 = vadd.f32 %v599, %v600
  %v602 = vrot.slane %v601, 1
  %v603 = vadd.f32 %v601, %v602
  %v604 = vsel %vm393, %v223, 0.0
  %v605 = vrot.slane %v604, 4
  %v606 = vadd.f32 %v604, %v605
  %v607 = vrot.slane %v606, 2
  %v608 = vadd.f32 %v606, %v607
  %v609 = vrot.slane %v608, 1
  %v610 = vadd.f32 %v608, %v609
  %v611 = vsel %vm393, %v224, 0.0
  %v612 = vrot.slane %v611, 4
  %v613 = vadd.f32 %v611, %v612
  %v614 = vrot.slane %v613, 2
  %v615 = vadd.f32 %v613, %v614
  %v616 = vrot.slane %v615, 1
  %v617 = vadd.f32 %v615, %v616
  %v618 = vsel %vm393, %v99, 0.0
  %v619 = vrot.slane %v618, 4
  %v620 = vadd.f32 %v618, %v619
  %v621 = vrot.slane %v620, 2
  %v622 = vadd.f32 %v620, %v621
  %v623 = vrot.slane %v622, 1
  %v624 = vadd.f32 %v622, %v623
  %v625 = vsel %vm393, %v225, 0.0
  %v626 = vrot.slane %v625, 4
  %v627 = vadd.f32 %v625, %v626
  %v628 = vrot.slane %v627, 2
  %v629 = vadd.f32 %v627, %v628
  %v630 = vrot.slane %v629, 1
  %v631 = vadd.f32 %v629, %v630
  %v632 = vsel %vm393, %v226, 0.0
  %v633 = vrot.slane %v632, 4
  %v634 = vadd.f32 %v632, %v633
  %v635 = vrot.slane %v634, 2
  %v636 = vadd.f32 %v634, %v635
  %v637 = vrot.slane %v636, 1
  %v638 = vadd.f32 %v636, %v637
  %v639 = vsel %vm393, %v227, 0.0
  %v640 = vrot.slane %v639, 4
  %v641 = vadd.f32 %v639, %v640
  %v642 = vrot.slane %v641, 2
  %v643 = vadd.f32 %v641, %v642
  %v644 = vrot.slane %v643, 1
  %v645 = vadd.f32 %v643, %v644
  %v646 = vsel %vm393, %v102, 0.0
  %v647 = vrot.slane %v646, 4
  %v648 = vadd.f32 %v646, %v647
  %v649 = vrot.slane %v648, 2
  %v650 = vadd.f32 %v648, %v649
  %v651 = vrot.slane %v650, 1
  %v652 = vadd.f32 %v650, %v651
  %v653 = vsel %vm393, %v228, 0.0
  %v654 = vrot.slane %v653, 4
  %v655 = vadd.f32 %v653, %v654
  %v656 = vrot.slane %v655, 2
  %v657 = vadd.f32 %v655, %v656
  %v658 = vrot.slane %v657, 1
  %v659 = vadd.f32 %v657, %v658
  %v660 = vsel %vm393, %v229, 0.0
  %v661 = vrot.slane %v660, 4
  %v662 = vadd.f32 %v660, %v661
  %v663 = vrot.slane %v662, 2
  %v664 = vadd.f32 %v662, %v663
  %v665 = vrot.slane %v664, 1
  %v666 = vadd.f32 %v664, %v665
  %v667 = vsel %vm393, %v230, 0.0
  %v668 = vrot.slane %v667, 4
  %v669 = vadd.f32 %v667, %v668
  %v670 = vrot.slane %v669, 2
  %v671 = vadd.f32 %v669, %v670
  %v672 = vrot.slane %v671, 1
  %v673 = vadd.f32 %v671, %v672
  %v674 = vsel %vm393, %v105, 0.0
  %v675 = vrot.slane %v674, 4
  %v676 = vadd.f32 %v674, %v675
  %v677 = vrot.slane %v676, 2
  %v678 = vadd.f32 %v676, %v677
  %v679 = vrot.slane %v678, 1
  %v680 = vadd.f32 %v678, %v679
  %v681 = vsel %vm393, %v231, 0.0
  %v682 = vrot.slane %v681, 4
  %v683 = vadd.f32 %v681, %v682
  %v684 = vrot.slane %v683, 2
  %v685 = vadd.f32 %v683, %v684
  %v686 = vrot.slane %v685, 1
  %v687 = vadd.f32 %v685, %v686
  %v688 = vsel %vm393, %v232, 0.0
  %v689 = vrot.slane %v688, 4
  %v690 = vadd.f32 %v688, %v689
  %v691 = vrot.slane %v690, 2
  %v692 = vadd.f32 %v690, %v691
  %v693 = vrot.slane %v692, 1
  %v694 = vadd.f32 %v692, %v693
  %v695 = vsel %vm393, %v233, 0.0
  %v696 = vrot.slane %v695, 4
  %v697 = vadd.f32 %v695, %v696
  %v698 = vrot.slane %v697, 2
  %v699 = vadd.f32 %v697, %v698
  %v700 = vrot.slane %v699, 1
  %v701 = vadd.f32 %v699, %v700
  %v702 = vsel %vm393, %v108, 0.0
  %v703 = vrot.slane %v702, 4
  %v704 = vadd.f32 %v702, %v703
  %v705 = vrot.slane %v704, 2
  %v706 = vadd.f32 %v704, %v705
  %v707 = vrot.slane %v706, 1
  %v708 = vadd.f32 %v706, %v707
  %v709 = vsel %vm393, %v234, 0.0
  %v710 = vrot.slane %v709, 4
  %v711 = vadd.f32 %v709, %v710
  %v712 = vrot.slane %v711, 2
  %v713 = vadd.f32 %v711, %v712
  %v714 = vrot.slane %v713, 1
  %v715 = vadd.f32 %v713, %v714
  %v716 = vsel %vm393, %v235, 0.0
  %v717 = vrot.slane %v716, 4
  %v718 = vadd.f32 %v716, %v717
  %v719 = vrot.slane %v718, 2
  %v720 = vadd.f32 %v718, %v719
  %v721 = vrot.slane %v720, 1
  %v722 = vadd.f32 %v720, %v721
  %v723 = vsel %vm393, %v236, 0.0
  %v724 = vrot.slane %v723, 4
  %v725 = vadd.f32 %v723, %v724
  %v726 = vrot.slane %v725, 2
  %v727 = vadd.f32 %v725, %v726
  %v728 = vrot.slane %v727, 1
  %v729 = vadd.f32 %v727, %v728
  %v730 = vsel %vm393, %v111, 0.0
  %v731 = vrot.slane %v730, 4
  %v732 = vadd.f32 %v730, %v731
  %v733 = vrot.slane %v732, 2
  %v734 = vadd.f32 %v732, %v733
  %v735 = vrot.slane %v734, 1
  %v736 = vadd.f32 %v734, %v735
  %v737 = vsel %vm393, %v237, 0.0
  %v738 = vrot.slane %v737, 4
  %v739 = vadd.f32 %v737, %v738
  %v740 = vrot.slane %v739, 2
  %v741 = vadd.f32 %v739, %v740
  %v742 = vrot.slane %v741, 1
  %v743 = vadd.f32 %v741, %v742
  %v744 = vsel %vm393, %v238, 0.0
  %v745 = vrot.slane %v744, 4
  %v746 = vadd.f32 %v744, %v745
  %v747 = vrot.slane %v746, 2
  %v748 = vadd.f32 %v746, %v747
  %v749 = vrot.slane %v748, 1
  %v750 = vadd.f32 %v748, %v749
  %v751 = vsel %vm393, %v239, 0.0
  %v752 = vrot.slane %v751, 4
  %v753 = vadd.f32 %v751, %v752
  %v754 = vrot.slane %v753, 2
  %v755 = vadd.f32 %v753, %v754
  %v756 = vrot.slane %v755, 1
  %v757 = vadd.f32 %v755, %v756
  %v758 = vsel %vm393, %v114, 0.0
  %v759 = vrot.slane %v758, 4
  %v760 = vadd.f32 %v758, %v759
  %v761 = vrot.slane %v760, 2
  %v762 = vadd.f32 %v760, %v761
  %v763 = vrot.slane %v762, 1
  %v764 = vadd.f32 %v762, %v763
  %v765 = vsel %vm393, %v240, 0.0
  %v766 = vrot.slane %v765, 4
  %v767 = vadd.f32 %v765, %v766
  %v768 = vrot.slane %v767, 2
  %v769 = vadd.f32 %v767, %v768
  %v770 = vrot.slane %v769, 1
  %v771 = vadd.f32 %v769, %v770
  %v772 = vsel %vm393, %v241, 0.0
  %v773 = vrot.slane %v772, 4
  %v774 = vadd.f32 %v772, %v773
  %v775 = vrot.slane %v774, 2
  %v776 = vadd.f32 %v774, %v775
  %v777 = vrot.slane %v776, 1
  %v778 = vadd.f32 %v776, %v777
  %v779 = vsel %vm393, %v242, 0.0
  %v780 = vrot.slane %v779, 4
  %v781 = vadd.f32 %v779, %v780
  %v782 = vrot.slane %v781, 2
  %v783 = vadd.f32 %v781, %v782
  %v784 = vrot.slane %v783, 1
  %v785 = vadd.f32 %v783, %v784
  %v786 = vsel %vm393, %v117, 0.0
  %v787 = vrot.slane %v786, 4
  %v788 = vadd.f32 %v786, %v787
  %v789 = vrot.slane %v788, 2
  %v790 = vadd.f32 %v788, %v789
  %v791 = vrot.slane %v790, 1
  %v792 = vadd.f32 %v790, %v791
  %v793 = vsel %vm393, %v243, 0.0
  %v794 = vrot.slane %v793, 4
  %v795 = vadd.f32 %v793, %v794
  %v796 = vrot.slane %v795, 2
  %v797 = vadd.f32 %v795, %v796
  %v798 = vrot.slane %v797, 1
  %v799 = vadd.f32 %v797, %v798
  %v800 = vsel %vm393, %v244, 0.0
  %v801 = vrot.slane %v800, 4
  %v802 = vadd.f32 %v800, %v801
  %v803 = vrot.slane %v802, 2
  %v804 = vadd.f32 %v802, %v803
  %v805 = vrot.slane %v804, 1
  %v806 = vadd.f32 %v804, %v805
  %v807 = vsel %vm393, %v245, 0.0
  %v808 = vrot.slane %v807, 4
  %v809 = vadd.f32 %v807, %v808
  %v810 = vrot.slane %v809, 2
  %v811 = vadd.f32 %v809, %v810
  %v812 = vrot.slane %v811, 1
  %v813 = vadd.f32 %v811, %v812
  %v814 = vsel %vm393, %v120, 0.0
  %v815 = vrot.slane %v814, 4
  %v816 = vadd.f32 %v814, %v815
  %v817 = vrot.slane %v816, 2
  %v818 = vadd.f32 %v816, %v817
  %v819 = vrot.slane %v818, 1
  %v820 = vadd.f32 %v818, %v819
  %v821 = vsel %vm393, %v246, 0.0
  %v822 = vrot.slane %v821, 4
  %v823 = vadd.f32 %v821, %v822
  %v824 = vrot.slane %v823, 2
  %v825 = vadd.f32 %v823, %v824
  %v826 = vrot.slane %v825, 1
  %v827 = vadd.f32 %v825, %v826
  %v828 = vsel %vm393, %v247, 0.0
  %v829 = vrot.slane %v828, 4
  %v830 = vadd.f32 %v828, %v829
  %v831 = vrot.slane %v830, 2
  %v832 = vadd.f32 %v830, %v831
  %v833 = vrot.slane %v832, 1
  %v834 = vadd.f32 %v832, %v833
  %v835 = vsel %vm393, %v248, 0.0
  %v836 = vrot.slane %v835, 4
  %v837 = vadd.f32 %v835, %v836
  %v838 = vrot.slane %v837, 2
  %v839 = vadd.f32 %v837, %v838
  %v840 = vrot.slane %v839, 1
  %v841 = vadd.f32 %v839, %v840
  %v842 = vsel %vm393, %v123, 0.0
  %v843 = vrot.slane %v842, 4
  %v844 = vadd.f32 %v842, %v843
  %v845 = vrot.slane %v844, 2
  %v846 = vadd.f32 %v844, %v845
  %v847 = vrot.slane %v846, 1
  %v848 = vadd.f32 %v846, %v847
  %v849 = vsel %vm393, %v249, 0.0
  %v850 = vrot.slane %v849, 4
  %v851 = vadd.f32 %v849, %v850
  %v852 = vrot.slane %v851, 2
  %v853 = vadd.f32 %v851, %v852
  %v854 = vrot.slane %v853, 1
  %v855 = vadd.f32 %v853, %v854
  %v856 = vsel %vm393, %v250, 0.0
  %v857 = vrot.slane %v856, 4
  %v858 = vadd.f32 %v856, %v857
  %v859 = vrot.slane %v858, 2
  %v860 = vadd.f32 %v858, %v859
  %v861 = vrot.slane %v860, 1
  %v862 = vadd.f32 %v860, %v861
  %v863 = vsel %vm393, %v251, 0.0
  %v864 = vrot.slane %v863, 4
  %v865 = vadd.f32 %v863, %v864
  %v866 = vrot.slane %v865, 2
  %v867 = vadd.f32 %v865, %v866
  %v868 = vrot.slane %v867, 1
  %v869 = vadd.f32 %v867, %v868
  %v870 = vsel %vm393, %v126, 0.0
  %v871 = vrot.slane %v870, 4
  %v872 = vadd.f32 %v870, %v871
  %v873 = vrot.slane %v872, 2
  %v874 = vadd.f32 %v872, %v873
  %v875 = vrot.slane %v874, 1
  %v876 = vadd.f32 %v874, %v875
  %v877 = vsel %vm393, %v252, 0.0
  %v878 = vrot.slane %v877, 4
  %v879 = vadd.f32 %v877, %v878
  %v880 = vrot.slane %v879, 2
  %v881 = vadd.f32 %v879, %v880
  %v882 = vrot.slane %v881, 1
  %v883 = vadd.f32 %v881, %v882
  %v884 = vsel %vm393, %v253, 0.0
  %v885 = vrot.slane %v884, 4
  %v886 = vadd.f32 %v884, %v885
  %v887 = vrot.slane %v886, 2
  %v888 = vadd.f32 %v886, %v887
  %v889 = vrot.slane %v888, 1
  %v890 = vadd.f32 %v888, %v889
  %v891 = vsel %vm393, %v254, 0.0
  %v892 = vrot.slane %v891, 4
  %v893 = vadd.f32 %v891, %v892
  %v894 = vrot.slane %v893, 2
  %v895 = vadd.f32 %v893, %v894
  %v896 = vrot.slane %v895, 1
  %v897 = vadd.f32 %v895, %v896
  %v898 = vsel %vm393, %v129, 0.0
  %v899 = vrot.slane %v898, 4
  %v900 = vadd.f32 %v898, %v899
  %v901 = vrot.slane %v900, 2
  %v902 = vadd.f32 %v900, %v901
  %v903 = vrot.slane %v902, 1
  %v904 = vadd.f32 %v902, %v903
  %v905 = vsel %vm393, %v255, 0.0
  %v906 = vrot.slane %v905, 4
  %v907 = vadd.f32 %v905, %v906
  %v908 = vrot.slane %v907, 2
  %v909 = vadd.f32 %v907, %v908
  %v910 = vrot.slane %v909, 1
  %v911 = vadd.f32 %v909, %v910
  %v912 = vsel %vm393, %v256, 0.0
  %v913 = vrot.slane %v912, 4
  %v914 = vadd.f32 %v912, %v913
  %v915 = vrot.slane %v914, 2
  %v916 = vadd.f32 %v914, %v915
  %v917 = vrot.slane %v916, 1
  %v918 = vadd.f32 %v916, %v917
  %v919 = vsel %vm393, %v257, 0.0
  %v920 = vrot.slane %v919, 4
  %v921 = vadd.f32 %v919, %v920
  %v922 = vrot.slane %v921, 2
  %v923 = vadd.f32 %v921, %v922
  %v924 = vrot.slane %v923, 1
  %v925 = vadd.f32 %v923, %v924
  %v926 = vsel %vm393, %v132, 0.0
  %v927 = vrot.slane %v926, 4
  %v928 = vadd.f32 %v926, %v927
  %v929 = vrot.slane %v928, 2
  %v930 = vadd.f32 %v928, %v929
  %v931 = vrot.slane %v930, 1
  %v932 = vadd.f32 %v930, %v931
  %v933 = vsel %vm393, %v258, 0.0
  %v934 = vrot.slane %v933, 4
  %v935 = vadd.f32 %v933, %v934
  %v936 = vrot.slane %v935, 2
  %v937 = vadd.f32 %v935, %v936
  %v938 = vrot.slane %v937, 1
  %v939 = vadd.f32 %v937, %v938
  %v940 = vsel %vm393, %v259, 0.0
  %v941 = vrot.slane %v940, 4
  %v942 = vadd.f32 %v940, %v941
  %v943 = vrot.slane %v942, 2
  %v944 = vadd.f32 %v942, %v943
  %v945 = vrot.slane %v944, 1
  %v946 = vadd.f32 %v944, %v945
  %v947 = vsel %vm393, %v260, 0.0
  %v948 = vrot.slane %v947, 4
  %v949 = vadd.f32 %v947, %v948
  %v950 = vrot.slane %v949, 2
  %v951 = vadd.f32 %v949, %v950
  %v952 = vrot.slane %v951, 1
  %v953 = vadd.f32 %v951, %v952
  %v954 = vsel %vm393, %v135, 0.0
  %v955 = vrot.slane %v954, 4
  %v956 = vadd.f32 %v954, %v955
  %v957 = vrot.slane %v956, 2
  %v958 = vadd.f32 %v956, %v957
  %v959 = vrot.slane %v958, 1
  %v960 = vadd.f32 %v958, %v959
  %v961 = vsel %vm393, %v261, 0.0
  %v962 = vrot.slane %v961, 4
  %v963 = vadd.f32 %v961, %v962
  %v964 = vrot.slane %v963, 2
  %v965 = vadd.f32 %v963, %v964
  %v966 = vrot.slane %v965, 1
  %v967 = vadd.f32 %v965, %v966
  %v968 = vsel %vm393, %v262, 0.0
  %v969 = vrot.slane %v968, 4
  %v970 = vadd.f32 %v968, %v969
  %v971 = vrot.slane %v970, 2
  %v972 = vadd.f32 %v970, %v971
  %v973 = vrot.slane %v972, 1
  %v974 = vadd.f32 %v972, %v973
  %v975 = vsel %vm393, %v263, 0.0
  %v976 = vrot.slane %v975, 4
  %v977 = vadd.f32 %v975, %v976
  %v978 = vrot.slane %v977, 2
  %v979 = vadd.f32 %v977, %v978
  %v980 = vrot.slane %v979, 1
  %v981 = vadd.f32 %v979, %v980
  %v982 = vsel %vm393, %v138, 0.0
  %v983 = vrot.slane %v982, 4
  %v984 = vadd.f32 %v982, %v983
  %v985 = vrot.slane %v984, 2
  %v986 = vadd.f32 %v984, %v985
  %v987 = vrot.slane %v986, 1
  %v988 = vadd.f32 %v986, %v987
  %v989 = vsel %vm393, %v264, 0.0
  %v990 = vrot.slane %v989, 4
  %v991 = vadd.f32 %v989, %v990
  %v992 = vrot.slane %v991, 2
  %v993 = vadd.f32 %v991, %v992
  %v994 = vrot.slane %v993, 1
  %v995 = vadd.f32 %v993, %v994
  %v996 = vsel %vm393, %v265, 0.0
  %v997 = vrot.slane %v996, 4
  %v998 = vadd.f32 %v996, %v997
  %v999 = vrot.slane %v998, 2
  %v1000 = vadd.f32 %v998, %v999
  %v1001 = vrot.slane %v1000, 1
  %v1002 = vadd.f32 %v1000, %v1001
  %v1003 = vsel %vm393, %v266, 0.0
  %v1004 = vrot.slane %v1003, 4
  %v1005 = vadd.f32 %v1003, %v1004
  %v1006 = vrot.slane %v1005, 2
  %v1007 = vadd.f32 %v1005, %v1006
  %v1008 = vrot.slane %v1007, 1
  %v1009 = vadd.f32 %v1007, %v1008
  %v1010 = vsel %vm393, %v141, 0.0
  %v1011 = vrot.slane %v1010, 4
  %v1012 = vadd.f32 %v1010, %v1011
  %v1013 = vrot.slane %v1012, 2
  %v1014 = vadd.f32 %v1012, %v1013
  %v1015 = vrot.slane %v1014, 1
  %v1016 = vadd.f32 %v1014, %v1015
  %v1017 = vsel %vm393, %v267, 0.0
  %v1018 = vrot.slane %v1017, 4
  %v1019 = vadd.f32 %v1017, %v1018
  %v1020 = vrot.slane %v1019, 2
  %v1021 = vadd.f32 %v1019, %v1020
  %v1022 = vrot.slane %v1021, 1
  %v1023 = vadd.f32 %v1021, %v1022
  %v1024 = vsel %vm393, %v268, 0.0
  %v1025 = vrot.slane %v1024, 4
  %v1026 = vadd.f32 %v1024, %v1025
  %v1027 = vrot.slane %v1026, 2
  %v1028 = vadd.f32 %v1026, %v1027
  %v1029 = vrot.slane %v1028, 1
  %v1030 = vadd.f32 %v1028, %v1029
  %v1031 = vsel %vm393, %v269, 0.0
  %v1032 = vrot.slane %v1031, 4
  %v1033 = vadd.f32 %v1031, %v1032
  %v1034 = vrot.slane %v1033, 2
  %v1035 = vadd.f32 %v1033, %v1034
  %v1036 = vrot.slane %v1035, 1
  %v1037 = vadd.f32 %v1035, %v1036
  %v1038 = vsel %vm393, %v144, 0.0
  %v1039 = vrot.slane %v1038, 4
  %v1040 = vadd.f32 %v1038, %v1039
  %v1041 = vrot.slane %v1040, 2
  %v1042 = vadd.f32 %v1040, %v1041
  %v1043 = vrot.slane %v1042, 1
  %v1044 = vadd.f32 %v1042, %v1043
  %v1045 = vsel %vm393, %v270, 0.0
  %v1046 = vrot.slane %v1045, 4
  %v1047 = vadd.f32 %v1045, %v1046
  %v1048 = vrot.slane %v1047, 2
  %v1049 = vadd.f32 %v1047, %v1048
  %v1050 = vrot.slane %v1049, 1
  %v1051 = vadd.f32 %v1049, %v1050
  %v1052 = vsel %vm393, %v271, 0.0
  %v1053 = vrot.slane %v1052, 4
  %v1054 = vadd.f32 %v1052, %v1053
  %v1055 = vrot.slane %v1054, 2
  %v1056 = vadd.f32 %v1054, %v1055
  %v1057 = vrot.slane %v1056, 1
  %v1058 = vadd.f32 %v1056, %v1057
  %v1059 = vsel %vm393, %v272, 0.0
  %v1060 = vrot.slane %v1059, 4
  %v1061 = vadd.f32 %v1059, %v1060
  %v1062 = vrot.slane %v1061, 2
  %v1063 = vadd.f32 %v1061, %v1062
  %v1064 = vrot.slane %v1063, 1
  %v1065 = vadd.f32 %v1063, %v1064
  %v1066 = vsel %vm393, %v147, 0.0
  %v1067 = vrot.slane %v1066, 4
  %v1068 = vadd.f32 %v1066, %v1067
  %v1069 = vrot.slane %v1068, 2
  %v1070 = vadd.f32 %v1068, %v1069
  %v1071 = vrot.slane %v1070, 1
  %v1072 = vadd.f32 %v1070, %v1071
  %v1073 = vsel %vm393, %v273, 0.0
  %v1074 = vrot.slane %v1073, 4
  %v1075 = vadd.f32 %v1073, %v1074
  %v1076 = vrot.slane %v1075, 2
  %v1077 = vadd.f32 %v1075, %v1076
  %v1078 = vrot.slane %v1077, 1
  %v1079 = vadd.f32 %v1077, %v1078
  %v1080 = vsel %vm393, %v274, 0.0
  %v1081 = vrot.slane %v1080, 4
  %v1082 = vadd.f32 %v1080, %v1081
  %v1083 = vrot.slane %v1082, 2
  %v1084 = vadd.f32 %v1082, %v1083
  %v1085 = vrot.slane %v1084, 1
  %v1086 = vadd.f32 %v1084, %v1085
  %v1087 = vsel %vm393, %v275, 0.0
  %v1088 = vrot.slane %v1087, 4
  %v1089 = vadd.f32 %v1087, %v1088
  %v1090 = vrot.slane %v1089, 2
  %v1091 = vadd.f32 %v1089, %v1090
  %v1092 = vrot.slane %v1091, 1
  %v1093 = vadd.f32 %v1091, %v1092
  %v1094 = vsel %vm393, %v150, 0.0
  %v1095 = vrot.slane %v1094, 4
  %v1096 = vadd.f32 %v1094, %v1095
  %v1097 = vrot.slane %v1096, 2
  %v1098 = vadd.f32 %v1096, %v1097
  %v1099 = vrot.slane %v1098, 1
  %v1100 = vadd.f32 %v1098, %v1099
  %v1101 = vsel %vm393, %v276, 0.0
  %v1102 = vrot.slane %v1101, 4
  %v1103 = vadd.f32 %v1101, %v1102
  %v1104 = vrot.slane %v1103, 2
  %v1105 = vadd.f32 %v1103, %v1104
  %v1106 = vrot.slane %v1105, 1
  %v1107 = vadd.f32 %v1105, %v1106
  %v1108 = vsel %vm393, %v277, 0.0
  %v1109 = vrot.slane %v1108, 4
  %v1110 = vadd.f32 %v1108, %v1109
  %v1111 = vrot.slane %v1110, 2
  %v1112 = vadd.f32 %v1110, %v1111
  %v1113 = vrot.slane %v1112, 1
  %v1114 = vadd.f32 %v1112, %v1113
  %v1115 = vsel %vm393, %v278, 0.0
  %v1116 = vrot.slane %v1115, 4
  %v1117 = vadd.f32 %v1115, %v1116
  %v1118 = vrot.slane %v1117, 2
  %v1119 = vadd.f32 %v1117, %v1118
  %v1120 = vrot.slane %v1119, 1
  %v1121 = vadd.f32 %v1119, %v1120
  %v1122 = vsel %vm393, %v153, 0.0
  %v1123 = vrot.slane %v1122, 4
  %v1124 = vadd.f32 %v1122, %v1123
  %v1125 = vrot.slane %v1124, 2
  %v1126 = vadd.f32 %v1124, %v1125
  %v1127 = vrot.slane %v1126, 1
  %v1128 = vadd.f32 %v1126, %v1127
  %v1129 = vsel %vm393, %v279, 0.0
  %v1130 = vrot.slane %v1129, 4
  %v1131 = vadd.f32 %v1129, %v1130
  %v1132 = vrot.slane %v1131, 2
  %v1133 = vadd.f32 %v1131, %v1132
  %v1134 = vrot.slane %v1133, 1
  %v1135 = vadd.f32 %v1133, %v1134
  %v1136 = vsel %vm393, %v280, 0.0
  %v1137 = vrot.slane %v1136, 4
  %v1138 = vadd.f32 %v1136, %v1137
  %v1139 = vrot.slane %v1138, 2
  %v1140 = vadd.f32 %v1138, %v1139
  %v1141 = vrot.slane %v1140, 1
  %v1142 = vadd.f32 %v1140, %v1141
  %v1143 = vsel %vm393, %v281, 0.0
  %v1144 = vrot.slane %v1143, 4
  %v1145 = vadd.f32 %v1143, %v1144
  %v1146 = vrot.slane %v1145, 2
  %v1147 = vadd.f32 %v1145, %v1146
  %v1148 = vrot.slane %v1147, 1
  %v1149 = vadd.f32 %v1147, %v1148
  %v1150 = vsel %vm393, %v156, 0.0
  %v1151 = vrot.slane %v1150, 4
  %v1152 = vadd.f32 %v1150, %v1151
  %v1153 = vrot.slane %v1152, 2
  %v1154 = vadd.f32 %v1152, %v1153
  %v1155 = vrot.slane %v1154, 1
  %v1156 = vadd.f32 %v1154, %v1155
  %v1157 = vsel %vm393, %v282, 0.0
  %v1158 = vrot.slane %v1157, 4
  %v1159 = vadd.f32 %v1157, %v1158
  %v1160 = vrot.slane %v1159, 2
  %v1161 = vadd.f32 %v1159, %v1160
  %v1162 = vrot.slane %v1161, 1
  %v1163 = vadd.f32 %v1161, %v1162
  %v1164 = vsel %vm393, %v283, 0.0
  %v1165 = vrot.slane %v1164, 4
  %v1166 = vadd.f32 %v1164, %v1165
  %v1167 = vrot.slane %v1166, 2
  %v1168 = vadd.f32 %v1166, %v1167
  %v1169 = vrot.slane %v1168, 1
  %v1170 = vadd.f32 %v1168, %v1169
  %v1171 = vsel %vm393, %v284, 0.0
  %v1172 = vrot.slane %v1171, 4
  %v1173 = vadd.f32 %v1171, %v1172
  %v1174 = vrot.slane %v1173, 2
  %v1175 = vadd.f32 %v1173, %v1174
  %v1176 = vrot.slane %v1175, 1
  %v1177 = vadd.f32 %v1175, %v1176
  %v1178 = vsel %vm393, %v159, 0.0
  %v1179 = vrot.slane %v1178, 4
  %v1180 = vadd.f32 %v1178, %v1179
  %v1181 = vrot.slane %v1180, 2
  %v1182 = vadd.f32 %v1180, %v1181
  %v1183 = vrot.slane %v1182, 1
  %v1184 = vadd.f32 %v1182, %v1183
  %v1185 = vsel %vm393, %v285, 0.0
  %v1186 = vrot.slane %v1185, 4
  %v1187 = vadd.f32 %v1185, %v1186
  %v1188 = vrot.slane %v1187, 2
  %v1189 = vadd.f32 %v1187, %v1188
  %v1190 = vrot.slane %v1189, 1
  %v1191 = vadd.f32 %v1189, %v1190
  %v1192 = vsel %vm393, %v286, 0.0
  %v1193 = vrot.slane %v1192, 4
  %v1194 = vadd.f32 %v1192, %v1193
  %v1195 = vrot.slane %v1194, 2
  %v1196 = vadd.f32 %v1194, %v1195
  %v1197 = vrot.slane %v1196, 1
  %v1198 = vadd.f32 %v1196, %v1197
  %v1199 = vsel %vm393, %v287, 0.0
  %v1200 = vrot.slane %v1199, 4
  %v1201 = vadd.f32 %v1199, %v1200
  %v1202 = vrot.slane %v1201, 2
  %v1203 = vadd.f32 %v1201, %v1202
  %v1204 = vrot.slane %v1203, 1
  %v1205 = vadd.f32 %v1203, %v1204
  %v1206 = vsel %vm393, %v162, 0.0
  %v1207 = vrot.slane %v1206, 4
  %v1208 = vadd.f32 %v1206, %v1207
  %v1209 = vrot.slane %v1208, 2
  %v1210 = vadd.f32 %v1208, %v1209
  %v1211 = vrot.slane %v1210, 1
  %v1212 = vadd.f32 %v1210, %v1211
  %v1213 = vsel %vm393, %v288, 0.0
  %v1214 = vrot.slane %v1213, 4
  %v1215 = vadd.f32 %v1213, %v1214
  %v1216 = vrot.slane %v1215, 2
  %v1217 = vadd.f32 %v1215, %v1216
  %v1218 = vrot.slane %v1217, 1
  %v1219 = vadd.f32 %v1217, %v1218
  %v1220 = vsel %vm393, %v289, 0.0
  %v1221 = vrot.slane %v1220, 4
  %v1222 = vadd.f32 %v1220, %v1221
  %v1223 = vrot.slane %v1222, 2
  %v1224 = vadd.f32 %v1222, %v1223
  %v1225 = vrot.slane %v1224, 1
  %v1226 = vadd.f32 %v1224, %v1225
  %v1227 = vsel %vm393, %v290, 0.0
  %v1228 = vrot.slane %v1227, 4
  %v1229 = vadd.f32 %v1227, %v1228
  %v1230 = vrot.slane %v1229, 2
  %v1231 = vadd.f32 %v1229, %v1230
  %v1232 = vrot.slane %v1231, 1
  %v1233 = vadd.f32 %v1231, %v1232
  %v1234 = vsel %vm393, %v165, 0.0
  %v1235 = vrot.slane %v1234, 4
  %v1236 = vadd.f32 %v1234, %v1235
  %v1237 = vrot.slane %v1236, 2
  %v1238 = vadd.f32 %v1236, %v1237
  %v1239 = vrot.slane %v1238, 1
  %v1240 = vadd.f32 %v1238, %v1239
  %v1241 = vsel %vm393, %v291, 0.0
  %v1242 = vrot.slane %v1241, 4
  %v1243 = vadd.f32 %v1241, %v1242
  %v1244 = vrot.slane %v1243, 2
  %v1245 = vadd.f32 %v1243, %v1244
  %v1246 = vrot.slane %v1245, 1
  %v1247 = vadd.f32 %v1245, %v1246
  %v1248 = vsel %vm393, %v292, 0.0
  %v1249 = vrot.slane %v1248, 4
  %v1250 = vadd.f32 %v1248, %v1249
  %v1251 = vrot.slane %v1250, 2
  %v1252 = vadd.f32 %v1250, %v1251
  %v1253 = vrot.slane %v1252, 1
  %v1254 = vadd.f32 %v1252, %v1253
  %v1255 = vsel %vm393, %v293, 0.0
  %v1256 = vrot.slane %v1255, 4
  %v1257 = vadd.f32 %v1255, %v1256
  %v1258 = vrot.slane %v1257, 2
  %v1259 = vadd.f32 %v1257, %v1258
  %v1260 = vrot.slane %v1259, 1
  %v1261 = vadd.f32 %v1259, %v1260
  %v1262 = vsel %vm393, %v168, 0.0
  %v1263 = vrot.slane %v1262, 4
  %v1264 = vadd.f32 %v1262, %v1263
  %v1265 = vrot.slane %v1264, 2
  %v1266 = vadd.f32 %v1264, %v1265
  %v1267 = vrot.slane %v1266, 1
  %v1268 = vadd.f32 %v1266, %v1267
  %v1269 = vsel %vm393, %v294, 0.0
  %v1270 = vrot.slane %v1269, 4
  %v1271 = vadd.f32 %v1269, %v1270
  %v1272 = vrot.slane %v1271, 2
  %v1273 = vadd.f32 %v1271, %v1272
  %v1274 = vrot.slane %v1273, 1
  %v1275 = vadd.f32 %v1273, %v1274
  %v1276 = vsel %vm393, %v295, 0.0
  %v1277 = vrot.slane %v1276, 4
  %v1278 = vadd.f32 %v1276, %v1277
  %v1279 = vrot.slane %v1278, 2
  %v1280 = vadd.f32 %v1278, %v1279
  %v1281 = vrot.slane %v1280, 1
  %v1282 = vadd.f32 %v1280, %v1281
  %v1283 = vsel %vm393, %v296, 0.0
  %v1284 = vrot.slane %v1283, 4
  %v1285 = vadd.f32 %v1283, %v1284
  %v1286 = vrot.slane %v1285, 2
  %v1287 = vadd.f32 %v1285, %v1286
  %v1288 = vrot.slane %v1287, 1
  %v1289 = vadd.f32 %v1287, %v1288
  %v1290 = vmul.f32 %v400, 0.25
  %v1291 = vmul.f32 %v407, 0.25
  %v1292 = vmul.f32 %v414, 0.25
  %v1293 = vmul.f32 %v421, 0.25
  %v1294 = vmul.f32 %v428, 0.25
  %v1295 = vmul.f32 %v435, 0.25
  %v1296 = vmul.f32 %v442, 0.25
  %v1297 = vmul.f32 %v449, 0.25
  %v1298 = vmul.f32 %v456, 0.25
  %v1299 = vmul.f32 %v463, 0.25
  %v1300 = vmul.f32 %v470, 0.25
  %v1301 = vmul.f32 %v477, 0.25
  %v1302 = vmul.f32 %v484, 0.25
  %v1303 = vmul.f32 %v491, 0.25
  %v1304 = vmul.f32 %v498, 0.25
  %v1305 = vmul.f32 %v505, 0.25
  %v1306 = vmul.f32 %v512, 0.25
  %v1307 = vmul.f32 %v519, 0.25
  %v1308 = vmul.f32 %v526, 0.25
  %v1309 = vmul.f32 %v533, 0.25
  %v1310 = vmul.f32 %v540, 0.25
  %v1311 = vmul.f32 %v547, 0.25
  %v1312 = vmul.f32 %v554, 0.25
  %v1313 = vmul.f32 %v561, 0.25
  %v1314 = vmul.f32 %v568, 0.25
  %v1315 = vmul.f32 %v575, 0.25
  %v1316 = vmul.f32 %v582, 0.25
  %v1317 = vmul.f32 %v589, 0.25
  %v1318 = vmul.f32 %v596, 0.25
  %v1319 = vmul.f32 %v603, 0.25
  %v1320 = vmul.f32 %v610, 0.25
  %v1321 = vmul.f32 %v617, 0.25
  %v1322 = vmul.f32 %v624, 0.25
  %v1323 = vmul.f32 %v631, 0.25
  %v1324 = vmul.f32 %v638, 0.25
  %v1325 = vmul.f32 %v645, 0.25
  %v1326 = vmul.f32 %v652, 0.25
  %v1327 = vmul.f32 %v659, 0.25
  %v1328 = vmul.f32 %v666, 0.25
  %v1329 = vmul.f32 %v673, 0.25
  %v1330 = vmul.f32 %v680, 0.25
  %v1331 = vmul.f32 %v687, 0.25
  %v1332 = vmul.f32 %v694, 0.25
  %v1333 = vmul.f32 %v701, 0.25
  %v1334 = vmul.f32 %v708, 0.25
  %v1335 = vmul.f32 %v715, 0.25
  %v1336 = vmul.f32 %v722, 0.25
  %v1337 = vmul.f32 %v729, 0.25
  %v1338 = vmul.f32 %v736, 0.25
  %v1339 = vmul.f32 %v743, 0.25
  %v1340 = vmul.f32 %v750, 0.25
  %v1341 = vmul.f32 %v757, 0.25
  %v1342 = vmul.f32 %v764, 0.25
  %v1343 = vmul.f32 %v771, 0.25
  %v1344 = vmul.f32 %v778, 0.25
  %v1345 = vmul.f32 %v785, 0.25
  %v1346 = vmul.f32 %v792, 0.25
  %v1347 = vmul.f32 %v799, 0.25
  %v1348 = vmul.f32 %v806, 0.25
  %v1349 = vmul.f32 %v813, 0.25
  %v1350 = vmul.f32 %v820, 0.25
  %v1351 = vmul.f32 %v827, 0.25
  %v1352 = vmul.f32 %v834, 0.25
  %v1353 = vmul.f32 %v841, 0.25
  %v1354 = vmul.f32 %v848, 0.25
  %v1355 = vmul.f32 %v855, 0.25
  %v1356 = vmul.f32 %v862, 0.25
  %v1357 = vmul.f32 %v869, 0.25
  %v1358 = vmul.f32 %v876, 0.25
  %v1359 = vmul.f32 %v883, 0.25
  %v1360 = vmul.f32 %v890, 0.25
  %v1361 = vmul.f32 %v897, 0.25
  %v1362 = vmul.f32 %v904, 0.25
  %v1363 = vmul.f32 %v911, 0.25
  %v1364 = vmul.f32 %v918, 0.25
  %v1365 = vmul.f32 %v925, 0.25
  %v1366 = vmul.f32 %v932, 0.25
  %v1367 = vmul.f32 %v939, 0.25
  %v1368 = vmul.f32 %v946, 0.25
  %v1369 = vmul.f32 %v953, 0.25
  %v1370 = vmul.f32 %v960, 0.25
  %v1371 = vmul.f32 %v967, 0.25
  %v1372 = vmul.f32 %v974, 0.25
  %v1373 = vmul.f32 %v981, 0.25
  %v1374 = vmul.f32 %v988, 0.25
  %v1375 = vmul.f32 %v995, 0.25
  %v1376 = vmul.f32 %v1002, 0.25
  %v1377 = vmul.f32 %v1009, 0.25
  %v1378 = vmul.f32 %v1016, 0.25
  %v1379 = vmul.f32 %v1023, 0.25
  %v1380 = vmul.f32 %v1030, 0.25
  %v1381 = vmul.f32 %v1037, 0.25
  %v1382 = vmul.f32 %v1044, 0.25
  %v1383 = vmul.f32 %v1051, 0.25
  %v1384 = vmul.f32 %v1058, 0.25
  %v1385 = vmul.f32 %v1065, 0.25
  %v1386 = vmul.f32 %v1072, 0.25
  %v1387 = vmul.f32 %v1079, 0.25
  %v1388 = vmul.f32 %v1086, 0.25
  %v1389 = vmul.f32 %v1093, 0.25
  %v1390 = vmul.f32 %v1100, 0.25
  %v1391 = vmul.f32 %v1107, 0.25
  %v1392 = vmul.f32 %v1114, 0.25
  %v1393 = vmul.f32 %v1121, 0.25
  %v1394 = vmul.f32 %v1128, 0.25
  %v1395 = vmul.f32 %v1135, 0.25
  %v1396 = vmul.f32 %v1142, 0.25
  %v1397 = vmul.f32 %v1149, 0.25
  %v1398 = vmul.f32 %v1156, 0.25
  %v1399 = vmul.f32 %v1163, 0.25
  %v1400 = vmul.f32 %v1170, 0.25
  %v1401 = vmul.f32 %v1177, 0.25
  %v1402 = vmul.f32 %v1184, 0.25
  %v1403 = vmul.f32 %v1191, 0.25
  %v1404 = vmul.f32 %v1198, 0.25
  %v1405 = vmul.f32 %v1205, 0.25
  %v1406 = vmul.f32 %v1212, 0.25
  %v1407 = vmul.f32 %v1219, 0.25
  %v1408 = vmul.f32 %v1226, 0.25
  %v1409 = vmul.f32 %v1233, 0.25
  %v1410 = vmul.f32 %v1240, 0.25
  %v1411 = vmul.f32 %v1247, 0.25
  %v1412 = vmul.f32 %v1254, 0.25
  %v1413 = vmul.f32 %v1261, 0.25
  %v1414 = vmul.f32 %v1268, 0.25
  %v1415 = vmul.f32 %v1275, 0.25
  %v1416 = vmul.f32 %v1282, 0.25
  %v1417 = vmul.f32 %v1289, 0.25
  %vm1546 = vcmask 1041409
  %v1547 = vsel %vm1546, %v1291, %v1290
  %vm1548 = vcmask 1042434
  %v1549 = vsel %vm1548, %v1292, %v1547
  %vm1550 = vcmask 1043459
  %v1551 = vsel %vm1550, %v1293, %v1549
  %vm1552 = vcmask 1044484
  %v1553 = vsel %vm1552, %v1294, %v1551
  %vm1554 = vcmask 1045509
  %v1555 = vsel %vm1554, %v1295, %v1553
  %vm1556 = vcmask 1046534
  %v1557 = vsel %vm1556, %v1296, %v1555
  %vm1558 = vcmask 1047559
  %v1559 = vsel %vm1558, %v1297, %v1557
  %v1560 = vsel %vm1546, %v1299, %v1298
  %v1561 = vsel %vm1548, %v1300, %v1560
  %v1562 = vsel %vm1550, %v1301, %v1561
  %v1563 = vsel %vm1552, %v1302, %v1562
  %v1564 = vsel %vm1554, %v1303, %v1563
  %v1565 = vsel %vm1556, %v1304, %v1564
  %v1566 = vsel %vm1558, %v1305, %v1565
  %v1567 = vsel %vm1546, %v1307, %v1306
  %v1568 = vsel %vm1548, %v1308, %v1567
  %v1569 = vsel %vm1550, %v1309, %v1568
  %v1570 = vsel %vm1552, %v1310, %v1569
  %v1571 = vsel %vm1554, %v1311, %v1570
  %v1572 = vsel %vm1556, %v1312, %v1571
  %v1573 = vsel %vm1558, %v1313, %v1572
  %v1574 = vsel %vm1546, %v1315, %v1314
  %v1575 = vsel %vm1548, %v1316, %v1574
  %v1576 = vsel %vm1550, %v1317, %v1575
  %v1577 = vsel %vm1552, %v1318, %v1576
  %v1578 = vsel %vm1554, %v1319, %v1577
  %v1579 = vsel %vm1556, %v1320, %v1578
  %v1580 = vsel %vm1558, %v1321, %v1579
  %v1581 = vsel %vm1546, %v1323, %v1322
  %v1582 = vsel %vm1548, %v1324, %v1581
  %v1583 = vsel %vm1550, %v1325, %v1582
  %v1584 = vsel %vm1552, %v1326, %v1583
  %v1585 = vsel %vm1554, %v1327, %v1584
  %v1586 = vsel %vm1556, %v1328, %v1585
  %v1587 = vsel %vm1558, %v1329, %v1586
  %v1588 = vsel %vm1546, %v1331, %v1330
  %v1589 = vsel %vm1548, %v1332, %v1588
  %v1590 = vsel %vm1550, %v1333, %v1589
  %v1591 = vsel %vm1552, %v1334, %v1590
  %v1592 = vsel %vm1554, %v1335, %v1591
  %v1593 = vsel %vm1556, %v1336, %v1592
  %v1594 = vsel %vm1558, %v1337, %v1593
  %v1595 = vsel %vm1546, %v1339, %v1338
  %v1596 = vsel %vm1548, %v1340, %v1595
  %v1597 = vsel %vm1550, %v1341, %v1596
  %v1598 = vsel %vm1552, %v1342, %v1597
  %v1599 = vsel %vm1554, %v1343, %v1598
  %v1600 = vsel %vm1556, %v1344, %v1599
  %v1601 = vsel %vm1558, %v1345, %v1600
  %v1602 = vsel %vm1546, %v1347, %v1346
  %v1603 = vsel %vm1548, %v1348, %v1602
  %v1604 = vsel %vm1550, %v1349, %v1603
  %v1605 = vsel %vm1552, %v1350, %v1604
  %v1606 = vsel %vm1554, %v1351, %v1605
  %v1607 = vsel %vm1556, %v1352, %v1606
  %v1608 = vsel %vm1558, %v1353, %v1607
  %v1609 = vsel %vm1546, %v1355, %v1354
  %v1610 = vsel %vm1548, %v1356, %v1609
  %v1611 = vsel %vm1550, %v1357, %v1610
  %v1612 = vsel %vm1552, %v1358, %v1611
  %v1613 = vsel %vm1554, %v1359, %v1612
  %v1614 = vsel %vm1556, %v1360, %v1613
  %v1615 = vsel %vm1558, %v1361, %v1614
  %v1616 = vsel %vm1546, %v1363, %v1362
  %v1617 = vsel %vm1548, %v1364, %v1616
  %v1618 = vsel %vm1550, %v1365, %v1617
  %v1619 = vsel %vm1552, %v1366, %v1618
  %v1620 = vsel %vm1554, %v1367, %v1619
  %v1621 = vsel %vm1556, %v1368, %v1620
  %v1622 = vsel %vm1558, %v1369, %v1621
  %v1623 = vsel %vm1546, %v1371, %v1370
  %v1624 = vsel %vm1548, %v1372, %v1623
  %v1625 = vsel %vm1550, %v1373, %v1624
  %v1626 = vsel %vm1552, %v1374, %v1625
  %v1627 = vsel %vm1554, %v1375, %v1626
  %v1628 = vsel %vm1556, %v1376, %v1627
  %v1629 = vsel %vm1558, %v1377, %v1628
  %v1630 = vsel %vm1546, %v1379, %v1378
  %v1631 = vsel %vm1548, %v1380, %v1630
  %v1632 = vsel %vm1550, %v1381, %v1631
  %v1633 = vsel %vm1552, %v1382, %v1632
  %v1634 = vsel %vm1554, %v1383, %v1633
  %v1635 = vsel %vm1556, %v1384, %v1634
  %v1636 = vsel %vm1558, %v1385, %v1635
  %v1637 = vsel %vm1546, %v1387, %v1386
  %v1638 = vsel %vm1548, %v1388, %v1637
  %v1639 = vsel %vm1550, %v1389, %v1638
  %v1640 = vsel %vm1552, %v1390, %v1639
  %v1641 = vsel %vm1554, %v1391, %v1640
  %v1642 = vsel %vm1556, %v1392, %v1641
  %v1643 = vsel %vm1558, %v1393, %v1642
  %v1644 = vsel %vm1546, %v1395, %v1394
  %v1645 = vsel %vm1548, %v1396, %v1644
  %v1646 = vsel %vm1550, %v1397, %v1645
  %v1647 = vsel %vm1552, %v1398, %v1646
  %v1648 = vsel %vm1554, %v1399, %v1647
  %v1649 = vsel %vm1556, %v1400, %v1648
  %v1650 = vsel %vm1558, %v1401, %v1649
  %v1651 = vsel %vm1546, %v1403, %v1402
  %v1652 = vsel %vm1548, %v1404, %v1651
  %v1653 = vsel %vm1550, %v1405, %v1652
  %v1654 = vsel %vm1552, %v1406, %v1653
  %v1655 = vsel %vm1554, %v1407, %v1654
  %v1656 = vsel %vm1556, %v1408, %v1655
  %v1657 = vsel %vm1558, %v1409, %v1656
  %v1658 = vsel %vm1546, %v1411, %v1410
  %v1659 = vsel %vm1548, %v1412, %v1658
  %v1660 = vsel %vm1550, %v1413, %v1659
  %v1661 = vsel %vm1552, %v1414, %v1660
  %v1662 = vsel %vm1554, %v1415, %v1661
  %v1663 = vsel %vm1556, %v1416, %v1662
  %v1664 = vsel %vm1558, %v1417, %v1663
  %1681 = vst.msk [vmem:[%s1] sm:$0xff] %vm72, %v1559
  %1682 = vst.msk [vmem:[%s1 + $0x8] sm:$0xff] %vm72, %v1566
  %1683 = vst.msk [vmem:[%s1 + $0x10] sm:$0xff] %vm72, %v1573
  %1684 = vst.msk [vmem:[%s1 + $0x18] sm:$0xff] %vm72, %v1580
  %1685 = vst.msk [vmem:[%s1 + $0x20] sm:$0xff] %vm72, %v1587
  %1686 = vst.msk [vmem:[%s1 + $0x28] sm:$0xff] %vm72, %v1594
  %1687 = vst.msk [vmem:[%s1 + $0x30] sm:$0xff] %vm72, %v1601
  %1688 = vst.msk [vmem:[%s1 + $0x38] sm:$0xff] %vm72, %v1608
  %1689 = vst.msk [vmem:[%s1 + $0x40] sm:$0xff] %vm72, %v1615
  %1690 = vst.msk [vmem:[%s1 + $0x48] sm:$0xff] %vm72, %v1622
  %1691 = vst.msk [vmem:[%s1 + $0x50] sm:$0xff] %vm72, %v1629
  %1692 = vst.msk [vmem:[%s1 + $0x58] sm:$0xff] %vm72, %v1636
  %1693 = vst.msk [vmem:[%s1 + $0x60] sm:$0xff] %vm72, %v1643
  %1694 = vst.msk [vmem:[%s1 + $0x68] sm:$0xff] %vm72, %v1650
  %1695 = vst.msk [vmem:[%s1 + $0x70] sm:$0xff] %vm72, %v1657
  %1696 = vst.msk [vmem:[%s1 + $0x78] sm:$0xff] %vm72, %v1664
  // Predicated region
  $region6: #{image_pyramids_forward.5} parent=0 // pred_check
    _
  $region7: #{image_pyramids_forward.5} parent=0 // pred_check_branch
    %1698 = sbr.rel (0) target = $region9
  $region8: #{image_pyramids_forward.5} parent=0 // pred_region
    _
  $region9: #{image_pyramids_forward.5} parent=0 // pred_fallthru
    _
  // Predicated region
  $region10: #{image_pyramids_forward.5} parent=0 // pred_check
    _
  $region11: #{image_pyramids_forward.5} parent=0 // pred_check_branch
    %1700 = sbr.rel (0) target = $region13
  $region12: #{image_pyramids_forward.5} parent=0 // pred_region
    _
  $region13: #{image_pyramids_forward.5} parent=0 // pred_fallthru
    _

// kernel: image_pyramids_forward.6
$region0: #{image_pyramids_forward.6}
  #allocation0 [shape = 'u32[]', space=smem, size = 0x4, offset = 0x4, fixed_abs, tag = 'smem constant byte address 0x4 - core index']
  #allocation1 [shape = 'u32[72,128]{1,0:T(1,128)}', space=vmem, size = 0x9000, scoped, tag = 'internal scratch']
  %s0 = inlined_call_operand.vmem [shape: f32[32,16,4], index: 0, kind: input, shape index: {}]
  %s1 = inlined_call_operand.vmem [shape: f32[8,4,4], index: 1, kind: output, shape index: {}]
  %s2 = sld [smem:[#allocation0]]
  $region14: #{image_pyramids_forward.6} parent=0
    _
  %s4 = ssub.s32 1, %s2
  %s5 = scalar_select 0, %s4, %s2
  // Predicated region
  $region2: #{image_pyramids_forward.6} parent=0 // pred_check
    _
  $region3: #{image_pyramids_forward.6} parent=0 // pred_check_branch
    %7 = sbr.rel (0) target = $region5
  $region4: #{image_pyramids_forward.6} parent=0 // pred_region
    _
  $region5: #{image_pyramids_forward.6} parent=0 // pred_fallthru
    _
  %v8 = vld [vmem:[%s0] sm:$0xff]
  %v9 = vld [vmem:[%s0 + $0x8] sm:$0xff]
  %v10 = vld [vmem:[%s0 + $0x10] sm:$0xff]
  %v11 = vld [vmem:[%s0 + $0x18] sm:$0xff]
  %v12 = vld [vmem:[%s0 + $0x20] sm:$0xff]
  %v13 = vld [vmem:[%s0 + $0x28] sm:$0xff]
  %v14 = vld [vmem:[%s0 + $0x30] sm:$0xff]
  %v15 = vld [vmem:[%s0 + $0x38] sm:$0xff]
  %v16 = vld [vmem:[%s0 + $0x40] sm:$0xff]
  %v17 = vld [vmem:[%s0 + $0x48] sm:$0xff]
  %v18 = vld [vmem:[%s0 + $0x50] sm:$0xff]
  %v19 = vld [vmem:[%s0 + $0x58] sm:$0xff]
  %v20 = vld [vmem:[%s0 + $0x60] sm:$0xff]
  %v21 = vld [vmem:[%s0 + $0x68] sm:$0xff]
  %v22 = vld [vmem:[%s0 + $0x70] sm:$0xff]
  %v23 = vld [vmem:[%s0 + $0x78] sm:$0xff]
  %v24 = vld [vmem:[%s0 + $0x80] sm:$0xff]
  %v25 = vld [vmem:[%s0 + $0x88] sm:$0xff]
  %v26 = vld [vmem:[%s0 + $0x90] sm:$0xff]
  %v27 = vld [vmem:[%s0 + $0x98] sm:$0xff]
  %v28 = vld [vmem:[%s0 + $0xa0] sm:$0xff]
  %v29 = vld [vmem:[%s0 + $0xa8] sm:$0xff]
  %v30 = vld [vmem:[%s0 + $0xb0] sm:$0xff]
  %v31 = vld [vmem:[%s0 + $0xb8] sm:$0xff]
  %v32 = vld [vmem:[%s0 + $0xc0] sm:$0xff]
  %v33 = vld [vmem:[%s0 + $0xc8] sm:$0xff]
  %v34 = vld [vmem:[%s0 + $0xd0] sm:$0xff]
  %v35 = vld [vmem:[%s0 + $0xd8] sm:$0xff]
  %v36 = vld [vmem:[%s0 + $0xe0] sm:$0xff]
  %v37 = vld [vmem:[%s0 + $0xe8] sm:$0xff]
  %v38 = vld [vmem:[%s0 + $0xf0] sm:$0xff]
  %v39 = vld [vmem:[%s0 + $0xf8] sm:$0xff]
  %v40 = vld [vmem:[%s0 + $0x100] sm:$0xff]
  %v41 = vld [vmem:[%s0 + $0x108] sm:$0xff]
  %v42 = vld [vmem:[%s0 + $0x110] sm:$0xff]
  %v43 = vld [vmem:[%s0 + $0x118] sm:$0xff]
  %v44 = vld [vmem:[%s0 + $0x120] sm:$0xff]
  %v45 = vld [vmem:[%s0 + $0x128] sm:$0xff]
  %v46 = vld [vmem:[%s0 + $0x130] sm:$0xff]
  %v47 = vld [vmem:[%s0 + $0x138] sm:$0xff]
  %v48 = vld [vmem:[%s0 + $0x140] sm:$0xff]
  %v49 = vld [vmem:[%s0 + $0x148] sm:$0xff]
  %v50 = vld [vmem:[%s0 + $0x150] sm:$0xff]
  %v51 = vld [vmem:[%s0 + $0x158] sm:$0xff]
  %v52 = vld [vmem:[%s0 + $0x160] sm:$0xff]
  %v53 = vld [vmem:[%s0 + $0x168] sm:$0xff]
  %v54 = vld [vmem:[%s0 + $0x170] sm:$0xff]
  %v55 = vld [vmem:[%s0 + $0x178] sm:$0xff]
  %v56 = vld [vmem:[%s0 + $0x180] sm:$0xff]
  %v57 = vld [vmem:[%s0 + $0x188] sm:$0xff]
  %v58 = vld [vmem:[%s0 + $0x190] sm:$0xff]
  %v59 = vld [vmem:[%s0 + $0x198] sm:$0xff]
  %v60 = vld [vmem:[%s0 + $0x1a0] sm:$0xff]
  %v61 = vld [vmem:[%s0 + $0x1a8] sm:$0xff]
  %v62 = vld [vmem:[%s0 + $0x1b0] sm:$0xff]
  %v63 = vld [vmem:[%s0 + $0x1b8] sm:$0xff]
  %v64 = vld [vmem:[%s0 + $0x1c0] sm:$0xff]
  %v65 = vld [vmem:[%s0 + $0x1c8] sm:$0xff]
  %v66 = vld [vmem:[%s0 + $0x1d0] sm:$0xff]
  %v67 = vld [vmem:[%s0 + $0x1d8] sm:$0xff]
  %v68 = vld [vmem:[%s0 + $0x1e0] sm:$0xff]
  %v69 = vld [vmem:[%s0 + $0x1e8] sm:$0xff]
  %v70 = vld [vmem:[%s0 + $0x1f0] sm:$0xff]
  %v71 = vld [vmem:[%s0 + $0x1f8] sm:$0xff]
  %vm72 = vcmask 31744
  %v73 = vsel %vm72, %v8, 0.0
  %v74 = vsel %vm72, %v10, 0.0
  %v75 = vadd.f32 %v73, %v74
  %v76 = vsel %vm72, %v12, 0.0
  %v77 = vadd.f32 %v75, %v76
  %v78 = vsel %vm72, %v14, 0.0
  %v79 = vadd.f32 %v77, %v78
  %v80 = vsel %vm72, %v9, 0.0
  %v81 = vsel %vm72, %v11, 0.0
  %v82 = vadd.f32 %v80, %v81
  %v83 = vsel %vm72, %v13, 0.0
  %v84 = vadd.f32 %v82, %v83
  %v85 = vsel %vm72, %v15, 0.0
  %v86 = vadd.f32 %v84, %v85
  %v87 = vsel %vm72, %v16, 0.0
  %v88 = vsel %vm72, %v18, 0.0
  %v89 = vadd.f32 %v87, %v88
  %v90 = vsel %vm72, %v20, 0.0
  %v91 = vadd.f32 %v89, %v90
  %v92 = vsel %vm72, %v22, 0.0
  %v93 = vadd.f32 %v91, %v92
  %v94 = vsel %vm72, %v17, 0.0
  %v95 = vsel %vm72, %v19, 0.0
  %v96 = vadd.f32 %v94, %v95
  %v97 = vsel %vm72, %v21, 0.0
  %v98 = vadd.f32 %v96, %v97
  %v99 = vsel %vm72, %v23, 0.0
  %v100 = vadd.f32 %v98, %v99
  %v101 = vsel %vm72, %v24, 0.0
  %v102 = vsel %vm72, %v26, 0.0
  %v103 = vadd.f32 %v101, %v102
  %v104 = vsel %vm72, %v28, 0.0
  %v105 = vadd.f32 %v103, %v104
  %v106 = vsel %vm72, %v30, 0.0
  %v107 = vadd.f32 %v105, %v106
  %v108 = vsel %vm72, %v25, 0.0
  %v109 = vsel %vm72, %v27, 0.0
  %v110 = vadd.f32 %v108, %v109
  %v111 = vsel %vm72, %v29, 0.0
  %v112 = vadd.f32 %v110, %v111
  %v113 = vsel %vm72, %v31, 0.0
  %v114 = vadd.f32 %v112, %v113
  %v115 = vsel %vm72, %v32, 0.0
  %v116 = vsel %vm72, %v34, 0.0
  %v117 = vadd.f32 %v115, %v116
  %v118 = vsel %vm72, %v36, 0.0
  %v119 = vadd.f32 %v117, %v118
  %v120 = vsel %vm72, %v38, 0.0
  %v121 = vadd.f32 %v119, %v120
  %v122 = vsel %vm72, %v33, 0.0
  %v123 = vsel %vm72, %v35, 0.0
  %v124 = vadd.f32 %v122, %v123
  %v125 = vsel %vm72, %v37, 0.0
  %v126 = vadd.f32 %v124, %v125
  %v127 = vsel %vm72, %v39, 0.0
  %v128 = vadd.f32 %v126, %v127
  %v129 = vsel %vm72, %v40, 0.0
  %v130 = vsel %vm72, %v42, 0.0
  %v131 = vadd.f32 %v129, %v130
  %v132 = vsel %vm72, %v44, 0.0
  %v133 = vadd.f32 %v131, %v132
  %v134 = vsel %vm72, %v46, 0.0
  %v135 = vadd.f32 %v133, %v134
  %v136 = vsel %vm72, %v41, 0.0
  %v137 = vsel %vm72, %v43, 0.0
  %v138 = vadd.f32 %v136, %v137
  %v139 = vsel %vm72, %v45, 0.0
  %v140 = vadd.f32 %v138, %v139
  %v141 = vsel %vm72, %v47, 0.0
  %v142 = vadd.f32 %v140, %v141
  %v143 = vsel %vm72, %v48, 0.0
  %v144 = vsel %vm72, %v50, 0.0
  %v145 = vadd.f32 %v143, %v144
  %v146 = vsel %vm72, %v52, 0.0
  %v147 = vadd.f32 %v145, %v146
  %v148 = vsel %vm72, %v54, 0.0
  %v149 = vadd.f32 %v147, %v148
  %v150 = vsel %vm72, %v49, 0.0
  %v151 = vsel %vm72, %v51, 0.0
  %v152 = vadd.f32 %v150, %v151
  %v153 = vsel %vm72, %v53, 0.0
  %v154 = vadd.f32 %v152, %v153
  %v155 = vsel %vm72, %v55, 0.0
  %v156 = vadd.f32 %v154, %v155
  %v157 = vsel %vm72, %v56, 0.0
  %v158 = vsel %vm72, %v58, 0.0
  %v159 = vadd.f32 %v157, %v158
  %v160 = vsel %vm72, %v60, 0.0
  %v161 = vadd.f32 %v159, %v160
  %v162 = vsel %vm72, %v62, 0.0
  %v163 = vadd.f32 %v161, %v162
  %v164 = vsel %vm72, %v57, 0.0
  %v165 = vsel %vm72, %v59, 0.0
  %v166 = vadd.f32 %v164, %v165
  %v167 = vsel %vm72, %v61, 0.0
  %v168 = vadd.f32 %v166, %v167
  %v169 = vsel %vm72, %v63, 0.0
  %v170 = vadd.f32 %v168, %v169
  %v171 = vsel %vm72, %v64, 0.0
  %v172 = vsel %vm72, %v66, 0.0
  %v173 = vadd.f32 %v171, %v172
  %v174 = vsel %vm72, %v68, 0.0
  %v175 = vadd.f32 %v173, %v174
  %v176 = vsel %vm72, %v70, 0.0
  %v177 = vadd.f32 %v175, %v176
  %v178 = vsel %vm72, %v65, 0.0
  %v179 = vsel %vm72, %v67, 0.0
  %v180 = vadd.f32 %v178, %v179
  %v181 = vsel %vm72, %v69, 0.0
  %v182 = vadd.f32 %v180, %v181
  %v183 = vsel %vm72, %v71, 0.0
  %v184 = vadd.f32 %v182, %v183
  %v201 = vrot.slane %v79, 4
  %v202 = vrot.slane %v86, 4
  %v203 = vrot.slane %v93, 4
  %v204 = vrot.slane %v100, 4
  %v205 = vrot.slane %v107, 4
  %v206 = vrot.slane %v114, 4
  %v207 = vrot.slane %v121, 4
  %v208 = vrot.slane %v128, 4
  %v209 = vrot.slane %v135, 4
  %v210 = vrot.slane %v142, 4
  %v211 = vrot.slane %v149, 4
  %v212 = vrot.slane %v156, 4
  %v213 = vrot.slane %v163, 4
  %v214 = vrot.slane %v170, 4
  %v215 = vrot.slane %v177, 4
  %v216 = vrot.slane %v184, 4
  %vm233 = vcmask 27648
  %v234 = vsel %vm233, %v79, 0.0
  %v235 = vrot.slane %v234, 4
  %v236 = vadd.f32 %v234, %v235
  %v237 = vrot.slane %v236, 2
  %v238 = vadd.f32 %v236, %v237
  %v239 = vrot.slane %v238, 1
  %v240 = vadd.f32 %v238, %v239
  %v241 = vsel %vm233, %v201, 0.0
  %v242 = vrot.slane %v241, 4
  %v243 = vadd.f32 %v241, %v242
  %v244 = vrot.slane %v243, 2
  %v245 = vadd.f32 %v243, %v244
  %v246 = vrot.slane %v245, 1
  %v247 = vadd.f32 %v245, %v246
  %v248 = vsel %vm233, %v86, 0.0
  %v249 = vrot.slane %v248, 4
  %v250 = vadd.f32 %v248, %v249
  %v251 = vrot.slane %v250, 2
  %v252 = vadd.f32 %v250, %v251
  %v253 = vrot.slane %v252, 1
  %v254 = vadd.f32 %v252, %v253
  %v255 = vsel %vm233, %v202, 0.0
  %v256 = vrot.slane %v255, 4
  %v257 = vadd.f32 %v255, %v256
  %v258 = vrot.slane %v257, 2
  %v259 = vadd.f32 %v257, %v258
  %v260 = vrot.slane %v259, 1
  %v261 = vadd.f32 %v259, %v260
  %v262 = vsel %vm233, %v93, 0.0
  %v263 = vrot.slane %v262, 4
  %v264 = vadd.f32 %v262, %v263
  %v265 = vrot.slane %v264, 2
  %v266 = vadd.f32 %v264, %v265
  %v267 = vrot.slane %v266, 1
  %v268 = vadd.f32 %v266, %v267
  %v269 = vsel %vm233, %v203, 0.0
  %v270 = vrot.slane %v269, 4
  %v271 = vadd.f32 %v269, %v270
  %v272 = vrot.slane %v271, 2
  %v273 = vadd.f32 %v271, %v272
  %v274 = vrot.slane %v273, 1
  %v275 = vadd.f32 %v273, %v274
  %v276 = vsel %vm233, %v100, 0.0
  %v277 = vrot.slane %v276, 4
  %v278 = vadd.f32 %v276, %v277
  %v279 = vrot.slane %v278, 2
  %v280 = vadd.f32 %v278, %v279
  %v281 = vrot.slane %v280, 1
  %v282 = vadd.f32 %v280, %v281
  %v283 = vsel %vm233, %v204, 0.0
  %v284 = vrot.slane %v283, 4
  %v285 = vadd.f32 %v283, %v284
  %v286 = vrot.slane %v285, 2
  %v287 = vadd.f32 %v285, %v286
  %v288 = vrot.slane %v287, 1
  %v289 = vadd.f32 %v287, %v288
  %v290 = vsel %vm233, %v107, 0.0
  %v291 = vrot.slane %v290, 4
  %v292 = vadd.f32 %v290, %v291
  %v293 = vrot.slane %v292, 2
  %v294 = vadd.f32 %v292, %v293
  %v295 = vrot.slane %v294, 1
  %v296 = vadd.f32 %v294, %v295
  %v297 = vsel %vm233, %v205, 0.0
  %v298 = vrot.slane %v297, 4
  %v299 = vadd.f32 %v297, %v298
  %v300 = vrot.slane %v299, 2
  %v301 = vadd.f32 %v299, %v300
  %v302 = vrot.slane %v301, 1
  %v303 = vadd.f32 %v301, %v302
  %v304 = vsel %vm233, %v114, 0.0
  %v305 = vrot.slane %v304, 4
  %v306 = vadd.f32 %v304, %v305
  %v307 = vrot.slane %v306, 2
  %v308 = vadd.f32 %v306, %v307
  %v309 = vrot.slane %v308, 1
  %v310 = vadd.f32 %v308, %v309
  %v311 = vsel %vm233, %v206, 0.0
  %v312 = vrot.slane %v311, 4
  %v313 = vadd.f32 %v311, %v312
  %v314 = vrot.slane %v313, 2
  %v315 = vadd.f32 %v313, %v314
  %v316 = vrot.slane %v315, 1
  %v317 = vadd.f32 %v315, %v316
  %v318 = vsel %vm233, %v121, 0.0
  %v319 = vrot.slane %v318, 4
  %v320 = vadd.f32 %v318, %v319
  %v321 = vrot.slane %v320, 2
  %v322 = vadd.f32 %v320, %v321
  %v323 = vrot.slane %v322, 1
  %v324 = vadd.f32 %v322, %v323
  %v325 = vsel %vm233, %v207, 0.0
  %v326 = vrot.slane %v325, 4
  %v327 = vadd.f32 %v325, %v326
  %v328 = vrot.slane %v327, 2
  %v329 = vadd.f32 %v327, %v328
  %v330 = vrot.slane %v329, 1
  %v331 = vadd.f32 %v329, %v330
  %v332 = vsel %vm233, %v128, 0.0
  %v333 = vrot.slane %v332, 4
  %v334 = vadd.f32 %v332, %v333
  %v335 = vrot.slane %v334, 2
  %v336 = vadd.f32 %v334, %v335
  %v337 = vrot.slane %v336, 1
  %v338 = vadd.f32 %v336, %v337
  %v339 = vsel %vm233, %v208, 0.0
  %v340 = vrot.slane %v339, 4
  %v341 = vadd.f32 %v339, %v340
  %v342 = vrot.slane %v341, 2
  %v343 = vadd.f32 %v341, %v342
  %v344 = vrot.slane %v343, 1
  %v345 = vadd.f32 %v343, %v344
  %v346 = vsel %vm233, %v135, 0.0
  %v347 = vrot.slane %v346, 4
  %v348 = vadd.f32 %v346, %v347
  %v349 = vrot.slane %v348, 2
  %v350 = vadd.f32 %v348, %v349
  %v351 = vrot.slane %v350, 1
  %v352 = vadd.f32 %v350, %v351
  %v353 = vsel %vm233, %v209, 0.0
  %v354 = vrot.slane %v353, 4
  %v355 = vadd.f32 %v353, %v354
  %v356 = vrot.slane %v355, 2
  %v357 = vadd.f32 %v355, %v356
  %v358 = vrot.slane %v357, 1
  %v359 = vadd.f32 %v357, %v358
  %v360 = vsel %vm233, %v142, 0.0
  %v361 = vrot.slane %v360, 4
  %v362 = vadd.f32 %v360, %v361
  %v363 = vrot.slane %v362, 2
  %v364 = vadd.f32 %v362, %v363
  %v365 = vrot.slane %v364, 1
  %v366 = vadd.f32 %v364, %v365
  %v367 = vsel %vm233, %v210, 0.0
  %v368 = vrot.slane %v367, 4
  %v369 = vadd.f32 %v367, %v368
  %v370 = vrot.slane %v369, 2
  %v371 = vadd.f32 %v369, %v370
  %v372 = vrot.slane %v371, 1
  %v373 = vadd.f32 %v371, %v372
  %v374 = vsel %vm233, %v149, 0.0
  %v375 = vrot.slane %v374, 4
  %v376 = vadd.f32 %v374, %v375
  %v377 = vrot.slane %v376, 2
  %v378 = vadd.f32 %v376, %v377
  %v379 = vrot.slane %v378, 1
  %v380 = vadd.f32 %v378, %v379
  %v381 = vsel %vm233, %v211, 0.0
  %v382 = vrot.slane %v381, 4
  %v383 = vadd.f32 %v381, %v382
  %v384 = vrot.slane %v383, 2
  %v385 = vadd.f32 %v383, %v384
  %v386 = vrot.slane %v385, 1
  %v387 = vadd.f32 %v385, %v386
  %v388 = vsel %vm233, %v156, 0.0
  %v389 = vrot.slane %v388, 4
  %v390 = vadd.f32 %v388, %v389
  %v391 = vrot.slane %v390, 2
  %v392 = vadd.f32 %v390, %v391
  %v393 = vrot.slane %v392, 1
  %v394 = vadd.f32 %v392, %v393
  %v395 = vsel %vm233, %v212, 0.0
  %v396 = vrot.slane %v395, 4
  %v397 = vadd.f32 %v395, %v396
  %v398 = vrot.slane %v397, 2
  %v399 = vadd.f32 %v397, %v398
  %v400 = vrot.slane %v399, 1
  %v401 = vadd.f32 %v399, %v400
  %v402 = vsel %vm233, %v163, 0.0
  %v403 = vrot.slane %v402, 4
  %v404 = vadd.f32 %v402, %v403
  %v405 = vrot.slane %v404, 2
  %v406 = vadd.f32 %v404, %v405
  %v407 = vrot.slane %v406, 1
  %v408 = vadd.f32 %v406, %v407
  %v409 = vsel %vm233, %v213, 0.0
  %v410 = vrot.slane %v409, 4
  %v411 = vadd.f32 %v409, %v410
  %v412 = vrot.slane %v411, 2
  %v413 = vadd.f32 %v411, %v412
  %v414 = vrot.slane %v413, 1
  %v415 = vadd.f32 %v413, %v414
  %v416 = vsel %vm233, %v170, 0.0
  %v417 = vrot.slane %v416, 4
  %v418 = vadd.f32 %v416, %v417
  %v419 = vrot.slane %v418, 2
  %v420 = vadd.f32 %v418, %v419
  %v421 = vrot.slane %v420, 1
  %v422 = vadd.f32 %v420, %v421
  %v423 = vsel %vm233, %v214, 0.0
  %v424 = vrot.slane %v423, 4
  %v425 = vadd.f32 %v423, %v424
  %v426 = vrot.slane %v425, 2
  %v427 = vadd.f32 %v425, %v426
  %v428 = vrot.slane %v427, 1
  %v429 = vadd.f32 %v427, %v428
  %v430 = vsel %vm233, %v177, 0.0
  %v431 = vrot.slane %v430, 4
  %v432 = vadd.f32 %v430, %v431
  %v433 = vrot.slane %v432, 2
  %v434 = vadd.f32 %v432, %v433
  %v435 = vrot.slane %v434, 1
  %v436 = vadd.f32 %v434, %v435
  %v437 = vsel %vm233, %v215, 0.0
  %v438 = vrot.slane %v437, 4
  %v439 = vadd.f32 %v437, %v438
  %v440 = vrot.slane %v439, 2
  %v441 = vadd.f32 %v439, %v440
  %v442 = vrot.slane %v441, 1
  %v443 = vadd.f32 %v441, %v442
  %v444 = vsel %vm233, %v184, 0.0
  %v445 = vrot.slane %v444, 4
  %v446 = vadd.f32 %v444, %v445
  %v447 = vrot.slane %v446, 2
  %v448 = vadd.f32 %v446, %v447
  %v449 = vrot.slane %v448, 1
  %v450 = vadd.f32 %v448, %v449
  %v451 = vsel %vm233, %v216, 0.0
  %v452 = vrot.slane %v451, 4
  %v453 = vadd.f32 %v451, %v452
  %v454 = vrot.slane %v453, 2
  %v455 = vadd.f32 %v453, %v454
  %v456 = vrot.slane %v455, 1
  %v457 = vadd.f32 %v455, %v456
  %v458 = vmul.f32 %v240, 0.0625
  %v459 = vmul.f32 %v247, 0.0625
  %v460 = vmul.f32 %v254, 0.0625
  %v461 = vmul.f32 %v261, 0.0625
  %v462 = vmul.f32 %v268, 0.0625
  %v463 = vmul.f32 %v275, 0.0625
  %v464 = vmul.f32 %v282, 0.0625
  %v465 = vmul.f32 %v289, 0.0625
  %v466 = vmul.f32 %v296, 0.0625
  %v467 = vmul.f32 %v303, 0.0625
  %v468 = vmul.f32 %v310, 0.0625
  %v469 = vmul.f32 %v317, 0.0625
  %v470 = vmul.f32 %v324, 0.0625
  %v471 = vmul.f32 %v331, 0.0625
  %v472 = vmul.f32 %v338, 0.0625
  %v473 = vmul.f32 %v345, 0.0625
  %v474 = vmul.f32 %v352, 0.0625
  %v475 = vmul.f32 %v359, 0.0625
  %v476 = vmul.f32 %v366, 0.0625
  %v477 = vmul.f32 %v373, 0.0625
  %v478 = vmul.f32 %v380, 0.0625
  %v479 = vmul.f32 %v387, 0.0625
  %v480 = vmul.f32 %v394, 0.0625
  %v481 = vmul.f32 %v401, 0.0625
  %v482 = vmul.f32 %v408, 0.0625
  %v483 = vmul.f32 %v415, 0.0625
  %v484 = vmul.f32 %v422, 0.0625
  %v485 = vmul.f32 %v429, 0.0625
  %v486 = vmul.f32 %v436, 0.0625
  %v487 = vmul.f32 %v443, 0.0625
  %v488 = vmul.f32 %v450, 0.0625
  %v489 = vmul.f32 %v457, 0.0625
  %vm522 = vcmask 1041409
  %v523 = vsel %vm522, %v459, %v458
  %vm524 = vcmask 1042434
  %v525 = vsel %vm524, %v460, %v523
  %vm526 = vcmask 1043459
  %v527 = vsel %vm526, %v461, %v525
  %v528 = vsel %vm522, %v463, %v462
  %v529 = vsel %vm524, %v464, %v528
  %v530 = vsel %vm526, %v465, %v529
  %v531 = vsel %vm522, %v467, %v466
  %v532 = vsel %vm524, %v468, %v531
  %v533 = vsel %vm526, %v469, %v532
  %v534 = vsel %vm522, %v471, %v470
  %v535 = vsel %vm524, %v472, %v534
  %v536 = vsel %vm526, %v473, %v535
  %v537 = vsel %vm522, %v475, %v474
  %v538 = vsel %vm524, %v476, %v537
  %v539 = vsel %vm526, %v477, %v538
  %v540 = vsel %vm522, %v479, %v478
  %v541 = vsel %vm524, %v480, %v540
  %v542 = vsel %vm526, %v481, %v541
  %v543 = vsel %vm522, %v483, %v482
  %v544 = vsel %vm524, %v484, %v543
  %v545 = vsel %vm526, %v485, %v544
  %v546 = vsel %vm522, %v487, %v486
  %v547 = vsel %vm524, %v488, %v546
  %v548 = vsel %vm526, %v489, %v547
  %557 = vst.msk [vmem:[%s1] sm:$0xf] %vm233, %v527
  %558 = vst.msk [vmem:[%s1 + $0x4] sm:$0xf] %vm233, %v530
  %559 = vst.msk [vmem:[%s1 + $0x8] sm:$0xf] %vm233, %v533
  %560 = vst.msk [vmem:[%s1 + $0xc] sm:$0xf] %vm233, %v536
  %561 = vst.msk [vmem:[%s1 + $0x10] sm:$0xf] %vm233, %v539
  %562 = vst.msk [vmem:[%s1 + $0x14] sm:$0xf] %vm233, %v542
  %563 = vst.msk [vmem:[%s1 + $0x18] sm:$0xf] %vm233, %v545
  %564 = vst.msk [vmem:[%s1 + $0x1c] sm:$0xf] %vm233, %v548
  // Predicated region
  $region6: #{image_pyramids_forward.6} parent=0 // pred_check
    _
  $region7: #{image_pyramids_forward.6} parent=0 // pred_check_branch
    %566 = sbr.rel (0) target = $region9
  $region8: #{image_pyramids_forward.6} parent=0 // pred_region
    _
  $region9: #{image_pyramids_forward.6} parent=0 // pred_fallthru
    _
  // Predicated region
  $region10: #{image_pyramids_forward.6} parent=0 // pred_check
    _
  $region11: #{image_pyramids_forward.6} parent=0 // pred_check_branch
    %568 = sbr.rel (0) target = $region13
  $region12: #{image_pyramids_forward.6} parent=0 // pred_region
    _
  $region13: #{image_pyramids_forward.6} parent=0 // pred_fallthru
    _

// kernel: image_pyramids_forward.7
$region0: #{image_pyramids_forward.7}
  #allocation0 [shape = 'u32[]', space=smem, size = 0x4, offset = 0x4, fixed_abs, tag = 'smem constant byte address 0x4 - core index']
  #allocation1 [shape = 'u32[72,128]{1,0:T(1,128)}', space=vmem, size = 0x9000, scoped, tag = 'internal scratch']
  %s0 = inlined_call_operand.vmem [shape: f32[32,16,4], index: 0, kind: input, shape index: {}]
  %s1 = inlined_call_operand.hbm [shape: f32[4,2,4], index: 1, kind: output, shape index: {}]
  %s2 = sld [smem:[#allocation0]]
  $region14: #{image_pyramids_forward.7} parent=0
    _
  %s4 = ssub.s32 1, %s2
  %s5 = scalar_select 0, %s4, %s2
  $region1: #{image_pyramids_forward.7} parent=0
    #allocation2 [shape = 'u8[4096]{0}', space=vmem, size = 0x1000, scoped, tag = 'output window, operand 0, single buffered']
    #allocation3 [shape = 's32[1]{0}', space=sflag, size = 0x4, scoped, tag = 'scoped memory for image_pyramids_forward.7']
    %6 = vsyncpa [#allocation3], 0
    // Predicated region
    $region2: #{image_pyramids_forward.7} parent=1 // pred_check
      _
    $region3: #{image_pyramids_forward.7} parent=1 // pred_check_branch
      %8 = sbr.rel (0) target = $region5
    $region4: #{image_pyramids_forward.7} parent=1 // pred_region
      _
    $region5: #{image_pyramids_forward.7} parent=1 // pred_fallthru
      _
    %v9 = vld [vmem:[%s0] sm:$0xff]
    %v10 = vld [vmem:[%s0 + $0x8] sm:$0xff]
    %v11 = vld [vmem:[%s0 + $0x10] sm:$0xff]
    %v12 = vld [vmem:[%s0 + $0x18] sm:$0xff]
    %v13 = vld [vmem:[%s0 + $0x20] sm:$0xff]
    %v14 = vld [vmem:[%s0 + $0x28] sm:$0xff]
    %v15 = vld [vmem:[%s0 + $0x30] sm:$0xff]
    %v16 = vld [vmem:[%s0 + $0x38] sm:$0xff]
    %v17 = vld [vmem:[%s0 + $0x40] sm:$0xff]
    %v18 = vld [vmem:[%s0 + $0x48] sm:$0xff]
    %v19 = vld [vmem:[%s0 + $0x50] sm:$0xff]
    %v20 = vld [vmem:[%s0 + $0x58] sm:$0xff]
    %v21 = vld [vmem:[%s0 + $0x60] sm:$0xff]
    %v22 = vld [vmem:[%s0 + $0x68] sm:$0xff]
    %v23 = vld [vmem:[%s0 + $0x70] sm:$0xff]
    %v24 = vld [vmem:[%s0 + $0x78] sm:$0xff]
    %v25 = vld [vmem:[%s0 + $0x80] sm:$0xff]
    %v26 = vld [vmem:[%s0 + $0x88] sm:$0xff]
    %v27 = vld [vmem:[%s0 + $0x90] sm:$0xff]
    %v28 = vld [vmem:[%s0 + $0x98] sm:$0xff]
    %v29 = vld [vmem:[%s0 + $0xa0] sm:$0xff]
    %v30 = vld [vmem:[%s0 + $0xa8] sm:$0xff]
    %v31 = vld [vmem:[%s0 + $0xb0] sm:$0xff]
    %v32 = vld [vmem:[%s0 + $0xb8] sm:$0xff]
    %v33 = vld [vmem:[%s0 + $0xc0] sm:$0xff]
    %v34 = vld [vmem:[%s0 + $0xc8] sm:$0xff]
    %v35 = vld [vmem:[%s0 + $0xd0] sm:$0xff]
    %v36 = vld [vmem:[%s0 + $0xd8] sm:$0xff]
    %v37 = vld [vmem:[%s0 + $0xe0] sm:$0xff]
    %v38 = vld [vmem:[%s0 + $0xe8] sm:$0xff]
    %v39 = vld [vmem:[%s0 + $0xf0] sm:$0xff]
    %v40 = vld [vmem:[%s0 + $0xf8] sm:$0xff]
    %v41 = vld [vmem:[%s0 + $0x100] sm:$0xff]
    %v42 = vld [vmem:[%s0 + $0x108] sm:$0xff]
    %v43 = vld [vmem:[%s0 + $0x110] sm:$0xff]
    %v44 = vld [vmem:[%s0 + $0x118] sm:$0xff]
    %v45 = vld [vmem:[%s0 + $0x120] sm:$0xff]
    %v46 = vld [vmem:[%s0 + $0x128] sm:$0xff]
    %v47 = vld [vmem:[%s0 + $0x130] sm:$0xff]
    %v48 = vld [vmem:[%s0 + $0x138] sm:$0xff]
    %v49 = vld [vmem:[%s0 + $0x140] sm:$0xff]
    %v50 = vld [vmem:[%s0 + $0x148] sm:$0xff]
    %v51 = vld [vmem:[%s0 + $0x150] sm:$0xff]
    %v52 = vld [vmem:[%s0 + $0x158] sm:$0xff]
    %v53 = vld [vmem:[%s0 + $0x160] sm:$0xff]
    %v54 = vld [vmem:[%s0 + $0x168] sm:$0xff]
    %v55 = vld [vmem:[%s0 + $0x170] sm:$0xff]
    %v56 = vld [vmem:[%s0 + $0x178] sm:$0xff]
    %v57 = vld [vmem:[%s0 + $0x180] sm:$0xff]
    %v58 = vld [vmem:[%s0 + $0x188] sm:$0xff]
    %v59 = vld [vmem:[%s0 + $0x190] sm:$0xff]
    %v60 = vld [vmem:[%s0 + $0x198] sm:$0xff]
    %v61 = vld [vmem:[%s0 + $0x1a0] sm:$0xff]
    %v62 = vld [vmem:[%s0 + $0x1a8] sm:$0xff]
    %v63 = vld [vmem:[%s0 + $0x1b0] sm:$0xff]
    %v64 = vld [vmem:[%s0 + $0x1b8] sm:$0xff]
    %v65 = vld [vmem:[%s0 + $0x1c0] sm:$0xff]
    %v66 = vld [vmem:[%s0 + $0x1c8] sm:$0xff]
    %v67 = vld [vmem:[%s0 + $0x1d0] sm:$0xff]
    %v68 = vld [vmem:[%s0 + $0x1d8] sm:$0xff]
    %v69 = vld [vmem:[%s0 + $0x1e0] sm:$0xff]
    %v70 = vld [vmem:[%s0 + $0x1e8] sm:$0xff]
    %v71 = vld [vmem:[%s0 + $0x1f0] sm:$0xff]
    %v72 = vld [vmem:[%s0 + $0x1f8] sm:$0xff]
    %vm73 = vcmask 31744
    %v74 = vsel %vm73, %v9, 0.0
    %v75 = vsel %vm73, %v11, 0.0
    %v76 = vadd.f32 %v74, %v75
    %v77 = vsel %vm73, %v13, 0.0
    %v78 = vadd.f32 %v76, %v77
    %v79 = vsel %vm73, %v15, 0.0
    %v80 = vadd.f32 %v78, %v79
    %v81 = vsel %vm73, %v17, 0.0
    %v82 = vadd.f32 %v80, %v81
    %v83 = vsel %vm73, %v19, 0.0
    %v84 = vadd.f32 %v82, %v83
    %v85 = vsel %vm73, %v21, 0.0
    %v86 = vadd.f32 %v84, %v85
    %v87 = vsel %vm73, %v23, 0.0
    %v88 = vadd.f32 %v86, %v87
    %v89 = vsel %vm73, %v10, 0.0
    %v90 = vsel %vm73, %v12, 0.0
    %v91 = vadd.f32 %v89, %v90
    %v92 = vsel %vm73, %v14, 0.0
    %v93 = vadd.f32 %v91, %v92
    %v94 = vsel %vm73, %v16, 0.0
    %v95 = vadd.f32 %v93, %v94
    %v96 = vsel %vm73, %v18, 0.0
    %v97 = vadd.f32 %v95, %v96
    %v98 = vsel %vm73, %v20, 0.0
    %v99 = vadd.f32 %v97, %v98
    %v100 = vsel %vm73, %v22, 0.0
    %v101 = vadd.f32 %v99, %v100
    %v102 = vsel %vm73, %v24, 0.0
    %v103 = vadd.f32 %v101, %v102
    %v104 = vsel %vm73, %v25, 0.0
    %v105 = vsel %vm73, %v27, 0.0
    %v106 = vadd.f32 %v104, %v105
    %v107 = vsel %vm73, %v29, 0.0
    %v108 = vadd.f32 %v106, %v107
    %v109 = vsel %vm73, %v31, 0.0
    %v110 = vadd.f32 %v108, %v109
    %v111 = vsel %vm73, %v33, 0.0
    %v112 = vadd.f32 %v110, %v111
    %v113 = vsel %vm73, %v35, 0.0
    %v114 = vadd.f32 %v112, %v113
    %v115 = vsel %vm73, %v37, 0.0
    %v116 = vadd.f32 %v114, %v115
    %v117 = vsel %vm73, %v39, 0.0
    %v118 = vadd.f32 %v116, %v117
    %v119 = vsel %vm73, %v26, 0.0
    %v120 = vsel %vm73, %v28, 0.0
    %v121 = vadd.f32 %v119, %v120
    %v122 = vsel %vm73, %v30, 0.0
    %v123 = vadd.f32 %v121, %v122
    %v124 = vsel %vm73, %v32, 0.0
    %v125 = vadd.f32 %v123, %v124
    %v126 = vsel %vm73, %v34, 0.0
    %v127 = vadd.f32 %v125, %v126
    %v128 = vsel %vm73, %v36, 0.0
    %v129 = vadd.f32 %v127, %v128
    %v130 = vsel %vm73, %v38, 0.0
    %v131 = vadd.f32 %v129, %v130
    %v132 = vsel %vm73, %v40, 0.0
    %v133 = vadd.f32 %v131, %v132
    %v134 = vsel %vm73, %v41, 0.0
    %v135 = vsel %vm73, %v43, 0.0
    %v136 = vadd.f32 %v134, %v135
    %v137 = vsel %vm73, %v45, 0.0
    %v138 = vadd.f32 %v136, %v137
    %v139 = vsel %vm73, %v47, 0.0
    %v140 = vadd.f32 %v138, %v139
    %v141 = vsel %vm73, %v49, 0.0
    %v142 = vadd.f32 %v140, %v141
    %v143 = vsel %vm73, %v51, 0.0
    %v144 = vadd.f32 %v142, %v143
    %v145 = vsel %vm73, %v53, 0.0
    %v146 = vadd.f32 %v144, %v145
    %v147 = vsel %vm73, %v55, 0.0
    %v148 = vadd.f32 %v146, %v147
    %v149 = vsel %vm73, %v42, 0.0
    %v150 = vsel %vm73, %v44, 0.0
    %v151 = vadd.f32 %v149, %v150
    %v152 = vsel %vm73, %v46, 0.0
    %v153 = vadd.f32 %v151, %v152
    %v154 = vsel %vm73, %v48, 0.0
    %v155 = vadd.f32 %v153, %v154
    %v156 = vsel %vm73, %v50, 0.0
    %v157 = vadd.f32 %v155, %v156
    %v158 = vsel %vm73, %v52, 0.0
    %v159 = vadd.f32 %v157, %v158
    %v160 = vsel %vm73, %v54, 0.0
    %v161 = vadd.f32 %v159, %v160
    %v162 = vsel %vm73, %v56, 0.0
    %v163 = vadd.f32 %v161, %v162
    %v164 = vsel %vm73, %v57, 0.0
    %v165 = vsel %vm73, %v59, 0.0
    %v166 = vadd.f32 %v164, %v165
    %v167 = vsel %vm73, %v61, 0.0
    %v168 = vadd.f32 %v166, %v167
    %v169 = vsel %vm73, %v63, 0.0
    %v170 = vadd.f32 %v168, %v169
    %v171 = vsel %vm73, %v65, 0.0
    %v172 = vadd.f32 %v170, %v171
    %v173 = vsel %vm73, %v67, 0.0
    %v174 = vadd.f32 %v172, %v173
    %v175 = vsel %vm73, %v69, 0.0
    %v176 = vadd.f32 %v174, %v175
    %v177 = vsel %vm73, %v71, 0.0
    %v178 = vadd.f32 %v176, %v177
    %v179 = vsel %vm73, %v58, 0.0
    %v180 = vsel %vm73, %v60, 0.0
    %v181 = vadd.f32 %v179, %v180
    %v182 = vsel %vm73, %v62, 0.0
    %v183 = vadd.f32 %v181, %v182
    %v184 = vsel %vm73, %v64, 0.0
    %v185 = vadd.f32 %v183, %v184
    %v186 = vsel %vm73, %v66, 0.0
    %v187 = vadd.f32 %v185, %v186
    %v188 = vsel %vm73, %v68, 0.0
    %v189 = vadd.f32 %v187, %v188
    %v190 = vsel %vm73, %v70, 0.0
    %v191 = vadd.f32 %v189, %v190
    %v192 = vsel %vm73, %v72, 0.0
    %v193 = vadd.f32 %v191, %v192
    %v194 = vsel %vm73, %v88, 0.0
    %v195 = vrot.slane %v194, 4
    %v196 = vadd.f32 %v194, %v195
    %v197 = vrot.slane %v196, 2
    %v198 = vadd.f32 %v196, %v197
    %v199 = vrot.slane %v198, 1
    %v200 = vadd.f32 %v198, %v199
    %v201 = vsel %vm73, %v103, 0.0
    %v202 = vrot.slane %v201, 4
    %v203 = vadd.f32 %v201, %v202
    %v204 = vrot.slane %v203, 2
    %v205 = vadd.f32 %v203, %v204
    %v206 = vrot.slane %v205, 1
    %v207 = vadd.f32 %v205, %v206
    %v208 = vsel %vm73, %v118, 0.0
    %v209 = vrot.slane %v208, 4
    %v210 = vadd.f32 %v208, %v209
    %v211 = vrot.slane %v210, 2
    %v212 = vadd.f32 %v210, %v211
    %v213 = vrot.slane %v212, 1
    %v214 = vadd.f32 %v212, %v213
    %v215 = vsel %vm73, %v133, 0.0
    %v216 = vrot.slane %v215, 4
    %v217 = vadd.f32 %v215, %v216
    %v218 = vrot.slane %v217, 2
    %v219 = vadd.f32 %v217, %v218
    %v220 = vrot.slane %v219, 1
    %v221 = vadd.f32 %v219, %v220
    %v222 = vsel %vm73, %v148, 0.0
    %v223 = vrot.slane %v222, 4
    %v224 = vadd.f32 %v222, %v223
    %v225 = vrot.slane %v224, 2
    %v226 = vadd.f32 %v224, %v225
    %v227 = vrot.slane %v226, 1
    %v228 = vadd.f32 %v226, %v227
    %v229 = vsel %vm73, %v163, 0.0
    %v230 = vrot.slane %v229, 4
    %v231 = vadd.f32 %v229, %v230
    %v232 = vrot.slane %v231, 2
    %v233 = vadd.f32 %v231, %v232
    %v234 = vrot.slane %v233, 1
    %v235 = vadd.f32 %v233, %v234
    %v236 = vsel %vm73, %v178, 0.0
    %v237 = vrot.slane %v236, 4
    %v238 = vadd.f32 %v236, %v237
    %v239 = vrot.slane %v238, 2
    %v240 = vadd.f32 %v238, %v239
    %v241 = vrot.slane %v240, 1
    %v242 = vadd.f32 %v240, %v241
    %v243 = vsel %vm73, %v193, 0.0
    %v244 = vrot.slane %v243, 4
    %v245 = vadd.f32 %v243, %v244
    %v246 = vrot.slane %v245, 2
    %v247 = vadd.f32 %v245, %v246
    %v248 = vrot.slane %v247, 1
    %v249 = vadd.f32 %v247, %v248
    %v250 = vmul.f32 %v200, 0.015625
    %v251 = vmul.f32 %v207, 0.015625
    %v252 = vmul.f32 %v214, 0.015625
    %v253 = vmul.f32 %v221, 0.015625
    %v254 = vmul.f32 %v228, 0.015625
    %v255 = vmul.f32 %v235, 0.015625
    %v256 = vmul.f32 %v242, 0.015625
    %v257 = vmul.f32 %v249, 0.015625
    %vm266 = vcmask 1041409
    %v267 = vsel %vm266, %v251, %v250
    %v268 = vsel %vm266, %v253, %v252
    %v269 = vsel %vm266, %v255, %v254
    %v270 = vsel %vm266, %v257, %v256
    %vm275 = vcmask 25600
    %276 = vst.msk [vmem:[#allocation2] sm:$0x3] %vm275, %v267
    %277 = vst.msk [vmem:[#allocation2 + $0x2] sm:$0x3] %vm275, %v268
    %278 = vst.msk [vmem:[#allocation2 + $0x4] sm:$0x3] %vm275, %v269
    %279 = vst.msk [vmem:[#allocation2 + $0x6] sm:$0x3] %vm275, %v270
    // Predicated region
    $region6: #{image_pyramids_forward.7} parent=1 // pred_check
      _
    $region7: #{image_pyramids_forward.7} parent=1 // pred_check_branch
      %281 = sbr.rel (0) target = $region9
    $region8: #{image_pyramids_forward.7} parent=1 // pred_region
      %283 = vsyncadd [#allocation3], 0
      %s284 = sshll.u32 [#allocation2], 4
      %s285 = int_to_ptr.vmem [resolvable:$true] %s284
      %s286 = sshll.u32 %s1, 4
      %s287 = int_to_ptr.hbm [resolvable:$true] %s286
      %292 = dma.vmem_to_hbm [thread:$0]  %s285, 128, %s287, [#allocation3], 32, 32, 2
    $region9: #{image_pyramids_forward.7} parent=1 // pred_fallthru
      _
    // Predicated region
    $region10: #{image_pyramids_forward.7} parent=1 // pred_check
      _
    $region11: #{image_pyramids_forward.7} parent=1 // pred_check_branch
      %294 = sbr.rel (0) target = $region13
    $region12: #{image_pyramids_forward.7} parent=1 // pred_region
      %296 = dma.done [#allocation3], 128
    $region13: #{image_pyramids_forward.7} parent=1 // pred_fallthru
      _
    %297 = vsyncpa [#allocation3], 1

</llo_original>
